<compile_context>
chip_gen: v6e
topology: v6e:2x2x1
jax: 0.10.0
libtpu: 0.0.40
codegen_flags: <defaults>
</compile_context>

<pallas_src>
import jax
import jax.numpy as jnp
from jax.experimental import pallas as pl
from jax.experimental.pallas import tpu as pltpu

LANE = 128          # vreg lane width
SUBLANE = 8         # vreg sublane width
TILE_M = 512        # node row tile (output rows per grid step)
TILE_K = 2048       # node contraction tile (A columns streamed per grid step)
VMEM_LIMIT = 32 * 1024 * 1024   # safe on all generations (v7x has 64 MiB/TC)


def _round_up(v, m):
    return ((v + m - 1) // m) * m


def _pad2(x, rows, cols):
    return jnp.pad(x, ((0, rows - x.shape[0]), (0, cols - x.shape[1])))


# ---------------------------------------------------------------------------
# Kernels
# ---------------------------------------------------------------------------
def _xw_kernel(x_ref, w_ref, xw_ref):
    """XW = X @ W1, computed once (hoisted out of conv1's contraction loop)."""
    xw_ref[...] = jnp.dot(x_ref[...], w_ref[...],
                          preferred_element_type=jnp.float32).astype(xw_ref.dtype)


def _conv1_kernel(a_ref, xw_ref, b1_ref, w2_ref, hw_ref, acc_ref):
    """acc[i] += A[i,k] @ XW[k]; epilogue: HW1[i] = relu(acc + b1) @ W2 (bf16).

    Emitting H1 @ W2 here (instead of H1) lets conv2 skip its own per-step
    feature GEMM and one full HBM pass over H1.
    """
    k = pl.program_id(1)

    @pl.when(k == 0)
    def _():
        acc_ref[...] = jnp.zeros_like(acc_ref)

    acc_ref[...] += jnp.dot(a_ref[...], xw_ref[...],
                            preferred_element_type=jnp.float32)

    @pl.when(k == pl.num_programs(1) - 1)
    def _():
        h1 = jnp.maximum(acc_ref[...] + b1_ref[...], 0.0).astype(jnp.bfloat16)
        hw_ref[...] = jnp.dot(h1, w2_ref[...],
                              preferred_element_type=jnp.float32
                              ).astype(hw_ref.dtype)


def _conv2_pool_kernel(a_ref, hw_ref, b2_ref, p_ref, pp_ref, acc_ref):
    """acc[i] += A[i,k] @ HW1[k]; epilogue: pp[i] = P[:, tile i] @ relu(acc+b2).

    Note: padded node rows of H2 are relu(b2) (nonzero) but are multiplied by
    the all-zero padded columns of P, so they never contribute.
    """
    k = pl.program_id(1)

    @pl.when(k == 0)
    def _():
        acc_ref[...] = jnp.zeros_like(acc_ref)

    acc_ref[...] += jnp.dot(a_ref[...], hw_ref[...],
                            preferred_element_type=jnp.float32)

    @pl.when(k == pl.num_programs(1) - 1)
    def _():
        h2 = jnp.maximum(acc_ref[...] + b2_ref[...], 0.0).astype(jnp.bfloat16)
        pp_ref[...] = jnp.dot(p_ref[...], h2,
                              preferred_element_type=jnp.float32)[None]


# ---------------------------------------------------------------------------
# Forward wrapper
# ---------------------------------------------------------------------------
def gcn_forward(a_hat, x, w1, b1, w2, b2, pool_mat, w_lin, b_lin,
                *, tile_m_max=TILE_M, tile_k_max=TILE_K):
    n, fin = x.shape
    g = pool_mat.shape[0]
    hid = w1.shape[1]
    out_c = w_lin.shape[1]

    fp = _round_up(fin, LANE)
    hp = _round_up(hid, LANE)
    gp = _round_up(g, SUBLANE)

    # Node-axis padding + rectangular (M, K) tiling. K tile >> M tile because
    # the kernel is HBM-bound on the A stream (less secondary-operand re-stream,
    # fewer ~0.35 us grid steps).
    n_pad = _round_up(n, LANE)
    tile_m = min(tile_m_max, n_pad)
    n_pad = _round_up(n_pad, tile_m)
    tile_k = min(tile_k_max, n_pad)
    n_pad = _round_up(n_pad, tile_k)
    # v7x megacore: give the parallel row-tile axis >= 2 iterations if possible.
    if n_pad == tile_m and n_pad % (2 * LANE) == 0:
        tile_m = n_pad // 2
    n_mt = n_pad // tile_m
    n_kt = n_pad // tile_k

    # Pad + cast. MXU streaming operands in bf16; biases stay f32 (VPU add).
    # TODO(synk): quantize A_hat (int8 on v5e/v6e, fp8 on v7x, values in [0,1])
    # and exploit the block-diagonal structure of batched graphs via
    # PrefetchScalarGridSpec banding to skip all-zero A tiles.
    a_p = _pad2(a_hat, n_pad, n_pad).astype(jnp.bfloat16)
    x_p = _pad2(x, n_pad, fp).astype(jnp.bfloat16)
    w1_p = _pad2(w1, fp, hp).astype(jnp.bfloat16)
    b1_p = _pad2(b1.reshape(1, -1), 1, hp).astype(jnp.float32)
    w2_p = _pad2(w2, hp, hp).astype(jnp.bfloat16)
    b2_p = _pad2(b2.reshape(1, -1), 1, hp).astype(jnp.float32)
    p_p = _pad2(pool_mat, gp, n_pad).astype(jnp.bfloat16)

    cp_1d = pltpu.CompilerParams(
        dimension_semantics=("parallel",), vmem_limit_bytes=VMEM_LIMIT)
    cp_2d = pltpu.CompilerParams(
        dimension_semantics=("parallel", "arbitrary"),
        vmem_limit_bytes=VMEM_LIMIT)

    conv_cost = pl.CostEstimate(
        flops=2 * n_pad * n_pad * hp,
        transcendentals=0,
        bytes_accessed=2 * n_pad * n_pad + 4 * n_pad * hp)

    # --- XW = X @ W1, once (tiny standalone kernel). --------------------------
    xw_tile = tile_k
    xw = pl.pallas_call(
        _xw_kernel,
        out_shape=jax.ShapeDtypeStruct((n_pad, hp), jnp.bfloat16),
        grid=(n_pad // xw_tile,),
        in_specs=[
            pl.BlockSpec((xw_tile, fp), lambda i: (i, 0)),
            pl.BlockSpec((fp, hp), lambda i: (0, 0)),
        ],
        out_specs=pl.BlockSpec((xw_tile, hp), lambda i: (i, 0)),
        compiler_params=cp_1d,
    )(x_p, w1_p)

    # --- conv1: HW1 = relu(A @ XW + b1) @ W2  (epilogue-fused second GEMM). ---
    hw1 = pl.pallas_call(
        _conv1_kernel,
        out_shape=jax.ShapeDtypeStruct((n_pad, hp), jnp.bfloat16),
        grid=(n_mt, n_kt),
        in_specs=[
            pl.BlockSpec((tile_m, tile_k), lambda i, k: (i, k)),   # A_hat
            pl.BlockSpec((tile_k, hp), lambda i, k: (k, 0)),       # XW
            pl.BlockSpec((1, hp), lambda i, k: (0, 0)),            # b1
            pl.BlockSpec((hp, hp), lambda i, k: (0, 0)),           # W2 (epilogue)
        ],
        out_specs=pl.BlockSpec((tile_m, hp), lambda i, k: (i, 0)),
        scratch_shapes=[pltpu.VMEM((tile_m, hp), jnp.float32)],
        compiler_params=cp_2d,
        cost_estimate=conv_cost,
    )(a_p, xw, b1_p, w2_p)

    # --- conv2 + fused mean-pool partial sums per row tile. -------------------
    pooled_partial = pl.pallas_call(
        _conv2_pool_kernel,
        out_shape=jax.ShapeDtypeStruct((n_mt, gp, hp), jnp.float32),
        grid=(n_mt, n_kt),
        in_specs=[
            pl.BlockSpec((tile_m, tile_k), lambda i, k: (i, k)),   # A_hat
            pl.BlockSpec((tile_k, hp), lambda i, k: (k, 0)),       # HW1
            pl.BlockSpec((1, hp), lambda i, k: (0, 0)),            # b2
            pl.BlockSpec((gp, tile_m), lambda i, k: (0, i)),       # P column slab
        ],
        out_specs=pl.BlockSpec((1, gp, hp), lambda i, k: (i, 0, 0)),
        scratch_shapes=[pltpu.VMEM((tile_m, hp), jnp.float32)],
        compiler_params=cp_2d,
        cost_estimate=conv_cost,
    )(a_p, hw1, b2_p, p_p)

    # Reduce pooled partials over row tiles and apply the final Linear in plain
    # JAX (the old third kernel was pure overhead); keep the tiny GEMM in f32.
    pooled = jnp.sum(pooled_partial, axis=0)[:g, :hid]
    return pooled @ w_lin + b_lin[None, :]


# ---------------------------------------------------------------------------
# Plain-JAX glue: build normalized adjacency and pooling matrix.
# ---------------------------------------------------------------------------
def build_normalized_adjacency(edge_index, num_nodes):
    """A_hat = D^{-1/2} (A + I) D^{-1/2} (PyG GCNConv default normalization).
    Duplicate edges are summed (matches message passing on multigraphs)."""
    src, dst = edge_index[0], edge_index[1]
    adj = jnp.zeros((num_nodes, num_nodes), jnp.float32)
    adj = adj.at[dst, src].add(1.0)                       # message flows src -> dst
    adj = adj + jnp.eye(num_nodes, dtype=jnp.float32)     # add self loops
    # TODO(synk): exact PyG add_remaining_self_loops semantics for graphs with
    # pre-existing explicit self-edges (glue code, not the kernel).
    deg = jnp.sum(adj, axis=1)
    dinv_sqrt = jnp.where(deg > 0, 1.0 / jnp.sqrt(deg), 0.0)
    return dinv_sqrt[:, None] * adj * dinv_sqrt[None, :]


def build_pool_matrix(batch, num_graphs):
    """P[g, n] = 1 / count(g) if batch[n] == g else 0  (global_mean_pool)."""
    one_hot = (batch[None, :] == jnp.arange(num_graphs)[:, None]).astype(jnp.float32)
    counts = jnp.maximum(jnp.sum(one_hot, axis=1, keepdims=True), 1.0)
    return one_hot / counts


def glorot(key, shape):
    fan_in, fan_out = shape[0], shape[1]
    limit = jnp.sqrt(6.0 / (fan_in + fan_out))
    return jax.random.uniform(key, shape, jnp.float32, -limit, limit)


if __name__ == "__main__":
    # Small deterministic problem: N=16 nodes, 2 graphs, in=8, hidden=32, out=4
    N, G = 16, 2
    in_channels, hidden_channels, out_channels = 8, 32, 4

    key = jax.random.PRNGKey(0)
    k_x, k_e, k_w1, k_b1, k_w2, k_b2, k_wl, k_bl = jax.random.split(key, 8)

    # node features
    x = jax.random.normal(k_x, (N, in_channels), jnp.float32)

    # random edges (directed pairs), deterministic
    num_edges = 40
    src = jax.random.randint(k_e, (num_edges,), 0, N)
    dst = jax.random.randint(jax.random.fold_in(k_e, 1), (num_edges,), 0, N)
    edge_index = jnp.stack([src, dst], axis=0)            # [2, E]

    # batch assignment: first half of nodes -> graph 0, rest -> graph 1
    batch = jnp.concatenate([jnp.zeros(N // 2, jnp.int32),
                             jnp.ones(N - N // 2, jnp.int32)])

    # deterministic parameters (synthetic init, matching module shapes)
    w1 = glorot(k_w1, (in_channels, hidden_channels))        # conv1.lin.weight^T
    b1 = 0.01 * jax.random.normal(k_b1, (hidden_channels,), jnp.float32)
    w2 = glorot(k_w2, (hidden_channels, hidden_channels))    # conv2.lin.weight^T
    b2 = 0.01 * jax.random.normal(k_b2, (hidden_channels,), jnp.float32)
    w_lin = glorot(k_wl, (hidden_channels, out_channels))    # lin.weight^T
    b_lin = 0.01 * jax.random.normal(k_bl, (out_channels,), jnp.float32)

    a_hat = build_normalized_adjacency(edge_index, N)        # [N, N]
    pool_mat = build_pool_matrix(batch, G)                   # [G, N]

    fwd = jax.jit(gcn_forward)
    out = fwd(a_hat, x, w1, b1, w2, b2, pool_mat, w_lin, b_lin)
    out = jax.block_until_ready(out)

    # Pure-JAX f32 reference of the same forward pass (loose tol: bf16 operands).
    h_ref = jnp.maximum(a_hat @ (x @ w1) + b1[None, :], 0.0)
    h_ref = jnp.maximum(a_hat @ (h_ref @ w2) + b2[None, :], 0.0)
    ref = (pool_mat @ h_ref) @ w_lin + b_lin[None, :]

    assert out.shape == (G, out_channels)
    assert bool(jnp.all(jnp.isfinite(out)))
    assert bool(jnp.allclose(out, ref, atol=1e-1, rtol=1e-1)), (
        f"max abs err {float(jnp.max(jnp.abs(out - ref)))}")
    print("KERNEL_OK")
</pallas_src>

<mosaic_0001>
module attributes {stable_mosaic.version = 11 : i64} {
  func.func @_xw_kernel(%arg0: i32, %arg1: memref<128x128xbf16, #tpu.memory_space<vmem>>, %arg2: memref<128x128xbf16, #tpu.memory_space<vmem>>, %arg3: memref<128x128xbf16, #tpu.memory_space<vmem>>) attributes {dimension_semantics = [#tpu.dimension_semantics<parallel>], iteration_bounds = array<i64: 1>, scalar_prefetch = 0 : i64, scratch_operands = 0 : i64, tpu.core_type = #tpu.core_type<tc>, window_params = [{transform_indices = @transform_0, window_bounds = array<i64: 128, 128>}, {pipeline_mode = #tpu.pipeline_mode<synchronous>, transform_indices = @transform_1, window_bounds = array<i64: 128, 128>}, {transform_indices = @transform_2, window_bounds = array<i64: 128, 128>}]} {
    %c0 = arith.constant 0 : index
    %c0_0 = arith.constant 0 : index
    %0 = vector.load %arg1[%c0, %c0_0] : memref<128x128xbf16, #tpu.memory_space<vmem>>, vector<128x128xbf16>
    %c0_1 = arith.constant 0 : index
    %c0_2 = arith.constant 0 : index
    %1 = vector.load %arg2[%c0_1, %c0_2] : memref<128x128xbf16, #tpu.memory_space<vmem>>, vector<128x128xbf16>
    %cst = arith.constant dense<0.000000e+00> : vector<128x128xf32>
    %2 = tpu.matmul %0, %1, %cst {dimension_numbers = #tpu.dot_dimension_numbers<[1], [0], [0], [1], [0, 0, 1, 1], [], []>} : vector<128x128xbf16>, vector<128x128xbf16>, vector<128x128xf32> -> vector<128x128xf32>
    %3 = arith.truncf %2 : vector<128x128xf32> to vector<128x128xbf16>
    %c0_3 = arith.constant 0 : index
    %c0_4 = arith.constant 0 : index
    %4 = vector.load %arg3[%c0_3, %c0_4] : memref<128x128xbf16, #tpu.memory_space<vmem>>, vector<128x128xbf16>
    tpu.vector_store %arg3[%c0_3, %c0_4], %3 {strides = array<i32>} : memref<128x128xbf16, #tpu.memory_space<vmem>>, vector<128x128xbf16>,
    return
  }
  func.func @transform_0(%arg0: i32) -> (i32, i32) {
    %c0_i32 = arith.constant 0 : i32
    %c0_i32_0 = arith.constant 0 : i32
    return %arg0, %c0_i32 : i32, i32
  }
  func.func @transform_1(%arg0: i32) -> (i32, i32) {
    %c0_i32 = arith.constant 0 : i32
    %c0_i32_0 = arith.constant 0 : i32
    %c0_i32_1 = arith.constant 0 : i32
    return %c0_i32, %c0_i32_0 : i32, i32
  }
  func.func @transform_2(%arg0: i32) -> (i32, i32) {
    %c0_i32 = arith.constant 0 : i32
    %c0_i32_0 = arith.constant 0 : i32
    return %arg0, %c0_i32 : i32, i32
  }
}

module attributes {stable_mosaic.version = 11 : i64} {
  func.func @_conv1_kernel(%arg0: i32, %arg1: i32, %arg2: memref<128x128xbf16, #tpu.memory_space<vmem>>, %arg3: memref<128x128xbf16, #tpu.memory_space<vmem>>, %arg4: memref<1x128xf32, #tpu.memory_space<vmem>>, %arg5: memref<128x128xbf16, #tpu.memory_space<vmem>>, %arg6: memref<128x128xbf16, #tpu.memory_space<vmem>>, %arg7: memref<128x128xf32, #tpu.memory_space<vmem>>) attributes {dimension_semantics = [#tpu.dimension_semantics<parallel>, #tpu.dimension_semantics<arbitrary>], iteration_bounds = array<i64: 1, 1>, scalar_prefetch = 0 : i64, scratch_operands = 1 : i64, tpu.core_type = #tpu.core_type<tc>, window_params = [{transform_indices = @transform_0, window_bounds = array<i64: 128, 128>}, {transform_indices = @transform_1, window_bounds = array<i64: 128, 128>}, {pipeline_mode = #tpu.pipeline_mode<synchronous>, transform_indices = @transform_2, window_bounds = array<i64: 1, 128>}, {pipeline_mode = #tpu.pipeline_mode<synchronous>, transform_indices = @transform_3, window_bounds = array<i64: 128, 128>}, {transform_indices = @transform_4, window_bounds = array<i64: 128, 128>}]} {
    %c0_i32 = arith.constant 0 : i32
    %0 = arith.cmpi eq, %arg1, %c0_i32 : i32
    %1 = arith.extui %0 : i1 to i32
    %c0_i32_0 = arith.constant 0 : i32
    %2 = arith.cmpi ne, %1, %c0_i32_0 : i32
    scf.if %2 {
      %cst_10 = arith.constant 0.000000e+00 : f32
      %12 = vector.broadcast %cst_10 : f32 to vector<128x128xf32>
      %c0_11 = arith.constant 0 : index
      %c0_12 = arith.constant 0 : index
      %13 = vector.load %arg7[%c0_11, %c0_12] : memref<128x128xf32, #tpu.memory_space<vmem>>, vector<128x128xf32>
      tpu.vector_store %arg7[%c0_11, %c0_12], %12 {strides = array<i32>} : memref<128x128xf32, #tpu.memory_space<vmem>>, vector<128x128xf32>,
    } else {
    }
    %c0 = arith.constant 0 : index
    %c0_1 = arith.constant 0 : index
    %3 = vector.load %arg7[%c0, %c0_1] : memref<128x128xf32, #tpu.memory_space<vmem>>, vector<128x128xf32>
    %c0_2 = arith.constant 0 : index
    %c0_3 = arith.constant 0 : index
    %4 = vector.load %arg2[%c0_2, %c0_3] : memref<128x128xbf16, #tpu.memory_space<vmem>>, vector<128x128xbf16>
    %c0_4 = arith.constant 0 : index
    %c0_5 = arith.constant 0 : index
    %5 = vector.load %arg3[%c0_4, %c0_5] : memref<128x128xbf16, #tpu.memory_space<vmem>>, vector<128x128xbf16>
    %cst = arith.constant dense<0.000000e+00> : vector<128x128xf32>
    %6 = tpu.matmul %4, %5, %cst {dimension_numbers = #tpu.dot_dimension_numbers<[1], [0], [0], [1], [0, 0, 1, 1], [], []>} : vector<128x128xbf16>, vector<128x128xbf16>, vector<128x128xf32> -> vector<128x128xf32>
    %7 = arith.addf %3, %6 : vector<128x128xf32>
    %c0_6 = arith.constant 0 : index
    %c0_7 = arith.constant 0 : index
    %8 = vector.load %arg7[%c0_6, %c0_7] : memref<128x128xf32, #tpu.memory_space<vmem>>, vector<128x128xf32>
    tpu.vector_store %arg7[%c0_6, %c0_7], %7 {strides = array<i32>} : memref<128x128xf32, #tpu.memory_space<vmem>>, vector<128x128xf32>,
    %c0_i32_8 = arith.constant 0 : i32
    %9 = arith.cmpi eq, %arg1, %c0_i32_8 : i32
    %10 = arith.extui %9 : i1 to i32
    %c0_i32_9 = arith.constant 0 : i32
    %11 = arith.cmpi ne, %10, %c0_i32_9 : i32
    scf.if %11 {
      %c0_10 = arith.constant 0 : index
      %c0_11 = arith.constant 0 : index
      %12 = vector.load %arg7[%c0_10, %c0_11] : memref<128x128xf32, #tpu.memory_space<vmem>>, vector<128x128xf32>
      %c0_12 = arith.constant 0 : index
      %c0_13 = arith.constant 0 : index
      %13 = vector.load %arg4[%c0_12, %c0_13] : memref<1x128xf32, #tpu.memory_space<vmem>>, vector<1x128xf32>
      %14 = vector.broadcast %13 : vector<1x128xf32> to vector<128x128xf32>
      %15 = arith.addf %12, %14 : vector<128x128xf32>
      %cst_14 = arith.constant 0.000000e+00 : f32
      %16 = vector.broadcast %cst_14 : f32 to vector<128x128xf32>
      %17 = arith.maximumf %15, %16 : vector<128x128xf32>
      %18 = arith.truncf %17 : vector<128x128xf32> to vector<128x128xbf16>
      %c0_15 = arith.constant 0 : index
      %c0_16 = arith.constant 0 : index
      %19 = vector.load %arg5[%c0_15, %c0_16] : memref<128x128xbf16, #tpu.memory_space<vmem>>, vector<128x128xbf16>
      %cst_17 = arith.constant dense<0.000000e+00> : vector<128x128xf32>
      %20 = tpu.matmul %18, %19, %cst_17 {dimension_numbers = #tpu.dot_dimension_numbers<[1], [0], [0], [1], [0, 0, 1, 1], [], []>} : vector<128x128xbf16>, vector<128x128xbf16>, vector<128x128xf32> -> vector<128x128xf32>
      %21 = arith.truncf %20 : vector<128x128xf32> to vector<128x128xbf16>
      %c0_18 = arith.constant 0 : index
      %c0_19 = arith.constant 0 : index
      %22 = vector.load %arg6[%c0_18, %c0_19] : memref<128x128xbf16, #tpu.memory_space<vmem>>, vector<128x128xbf16>
      tpu.vector_store %arg6[%c0_18, %c0_19], %21 {strides = array<i32>} : memref<128x128xbf16, #tpu.memory_space<vmem>>, vector<128x128xbf16>,
    } else {
    }
    return
  }
  func.func @transform_0(%arg0: i32, %arg1: i32) -> (i32, i32) {
    %c0_i32 = arith.constant 0 : i32
    return %arg0, %arg1 : i32, i32
  }
  func.func @transform_1(%arg0: i32, %arg1: i32) -> (i32, i32) {
    %c0_i32 = arith.constant 0 : i32
    %c0_i32_0 = arith.constant 0 : i32
    return %arg1, %c0_i32 : i32, i32
  }
  func.func @transform_2(%arg0: i32, %arg1: i32) -> (i32, i32) {
    %c0_i32 = arith.constant 0 : i32
    %c0_i32_0 = arith.constant 0 : i32
    %c0_i32_1 = arith.constant 0 : i32
    return %c0_i32, %c0_i32_0 : i32, i32
  }
  func.func @transform_3(%arg0: i32, %arg1: i32) -> (i32, i32) {
    %c0_i32 = arith.constant 0 : i32
    %c0_i32_0 = arith.constant 0 : i32
    %c0_i32_1 = arith.constant 0 : i32
    return %c0_i32, %c0_i32_0 : i32, i32
  }
  func.func @transform_4(%arg0: i32, %arg1: i32) -> (i32, i32) {
    %c0_i32 = arith.constant 0 : i32
    %c0_i32_0 = arith.constant 0 : i32
    return %arg0, %c0_i32 : i32, i32
  }
}

module attributes {stable_mosaic.version = 11 : i64} {
  func.func @_conv2_pool_kernel(%arg0: i32, %arg1: i32, %arg2: memref<128x128xbf16, #tpu.memory_space<vmem>>, %arg3: memref<128x128xbf16, #tpu.memory_space<vmem>>, %arg4: memref<1x128xf32, #tpu.memory_space<vmem>>, %arg5: memref<8x128xbf16, #tpu.memory_space<vmem>>, %arg6: memref<1x8x128xf32, #tpu.memory_space<vmem>>, %arg7: memref<128x128xf32, #tpu.memory_space<vmem>>) attributes {dimension_semantics = [#tpu.dimension_semantics<parallel>, #tpu.dimension_semantics<arbitrary>], iteration_bounds = array<i64: 1, 1>, scalar_prefetch = 0 : i64, scratch_operands = 1 : i64, tpu.core_type = #tpu.core_type<tc>, window_params = [{transform_indices = @transform_0, window_bounds = array<i64: 128, 128>}, {transform_indices = @transform_1, window_bounds = array<i64: 128, 128>}, {pipeline_mode = #tpu.pipeline_mode<synchronous>, transform_indices = @transform_2, window_bounds = array<i64: 1, 128>}, {transform_indices = @transform_3, window_bounds = array<i64: 8, 128>}, {transform_indices = @transform_4, window_bounds = array<i64: 1, 8, 128>}]} {
    %c0_i32 = arith.constant 0 : i32
    %0 = arith.cmpi eq, %arg1, %c0_i32 : i32
    %1 = arith.extui %0 : i1 to i32
    %c0_i32_0 = arith.constant 0 : i32
    %2 = arith.cmpi ne, %1, %c0_i32_0 : i32
    scf.if %2 {
      %cst_10 = arith.constant 0.000000e+00 : f32
      %12 = vector.broadcast %cst_10 : f32 to vector<128x128xf32>
      %c0_11 = arith.constant 0 : index
      %c0_12 = arith.constant 0 : index
      %13 = vector.load %arg7[%c0_11, %c0_12] : memref<128x128xf32, #tpu.memory_space<vmem>>, vector<128x128xf32>
      tpu.vector_store %arg7[%c0_11, %c0_12], %12 {strides = array<i32>} : memref<128x128xf32, #tpu.memory_space<vmem>>, vector<128x128xf32>,
    } else {
    }
    %c0 = arith.constant 0 : index
    %c0_1 = arith.constant 0 : index
    %3 = vector.load %arg7[%c0, %c0_1] : memref<128x128xf32, #tpu.memory_space<vmem>>, vector<128x128xf32>
    %c0_2 = arith.constant 0 : index
    %c0_3 = arith.constant 0 : index
    %4 = vector.load %arg2[%c0_2, %c0_3] : memref<128x128xbf16, #tpu.memory_space<vmem>>, vector<128x128xbf16>
    %c0_4 = arith.constant 0 : index
    %c0_5 = arith.constant 0 : index
    %5 = vector.load %arg3[%c0_4, %c0_5] : memref<128x128xbf16, #tpu.memory_space<vmem>>, vector<128x128xbf16>
    %cst = arith.constant dense<0.000000e+00> : vector<128x128xf32>
    %6 = tpu.matmul %4, %5, %cst {dimension_numbers = #tpu.dot_dimension_numbers<[1], [0], [0], [1], [0, 0, 1, 1], [], []>} : vector<128x128xbf16>, vector<128x128xbf16>, vector<128x128xf32> -> vector<128x128xf32>
    %7 = arith.addf %3, %6 : vector<128x128xf32>
    %c0_6 = arith.constant 0 : index
    %c0_7 = arith.constant 0 : index
    %8 = vector.load %arg7[%c0_6, %c0_7] : memref<128x128xf32, #tpu.memory_space<vmem>>, vector<128x128xf32>
    tpu.vector_store %arg7[%c0_6, %c0_7], %7 {strides = array<i32>} : memref<128x128xf32, #tpu.memory_space<vmem>>, vector<128x128xf32>,
    %c0_i32_8 = arith.constant 0 : i32
    %9 = arith.cmpi eq, %arg1, %c0_i32_8 : i32
    %10 = arith.extui %9 : i1 to i32
    %c0_i32_9 = arith.constant 0 : i32
    %11 = arith.cmpi ne, %10, %c0_i32_9 : i32
    scf.if %11 {
      %c0_10 = arith.constant 0 : index
      %c0_11 = arith.constant 0 : index
      %12 = vector.load %arg7[%c0_10, %c0_11] : memref<128x128xf32, #tpu.memory_space<vmem>>, vector<128x128xf32>
      %c0_12 = arith.constant 0 : index
      %c0_13 = arith.constant 0 : index
      %13 = vector.load %arg4[%c0_12, %c0_13] : memref<1x128xf32, #tpu.memory_space<vmem>>, vector<1x128xf32>
      %14 = vector.broadcast %13 : vector<1x128xf32> to vector<128x128xf32>
      %15 = arith.addf %12, %14 : vector<128x128xf32>
      %cst_14 = arith.constant 0.000000e+00 : f32
      %16 = vector.broadcast %cst_14 : f32 to vector<128x128xf32>
      %17 = arith.maximumf %15, %16 : vector<128x128xf32>
      %18 = arith.truncf %17 : vector<128x128xf32> to vector<128x128xbf16>
      %c0_15 = arith.constant 0 : index
      %c0_16 = arith.constant 0 : index
      %19 = vector.load %arg5[%c0_15, %c0_16] : memref<8x128xbf16, #tpu.memory_space<vmem>>, vector<8x128xbf16>
      %cst_17 = arith.constant dense<0.000000e+00> : vector<8x128xf32>
      %20 = tpu.matmul %19, %18, %cst_17 {dimension_numbers = #tpu.dot_dimension_numbers<[1], [0], [0], [1], [0, 0, 1, 1], [], []>} : vector<8x128xbf16>, vector<128x128xbf16>, vector<8x128xf32> -> vector<8x128xf32>
      %21 = vector.shape_cast %20 : vector<8x128xf32> to vector<1x8x128xf32>
      %c0_18 = arith.constant 0 : index
      %c0_19 = arith.constant 0 : index
      %c0_20 = arith.constant 0 : index
      %22 = vector.load %arg6[%c0_18, %c0_19, %c0_20] : memref<1x8x128xf32, #tpu.memory_space<vmem>>, vector<1x8x128xf32>
      tpu.vector_store %arg6[%c0_18, %c0_19, %c0_20], %21 {strides = array<i32>} : memref<1x8x128xf32, #tpu.memory_space<vmem>>, vector<1x8x128xf32>,
    } else {
    }
    return
  }
  func.func @transform_0(%arg0: i32, %arg1: i32) -> (i32, i32) {
    %c0_i32 = arith.constant 0 : i32
    return %arg0, %arg1 : i32, i32
  }
  func.func @transform_1(%arg0: i32, %arg1: i32) -> (i32, i32) {
    %c0_i32 = arith.constant 0 : i32
    %c0_i32_0 = arith.constant 0 : i32
    return %arg1, %c0_i32 : i32, i32
  }
  func.func @transform_2(%arg0: i32, %arg1: i32) -> (i32, i32) {
    %c0_i32 = arith.constant 0 : i32
    %c0_i32_0 = arith.constant 0 : i32
    %c0_i32_1 = arith.constant 0 : i32
    return %c0_i32, %c0_i32_0 : i32, i32
  }
  func.func @transform_3(%arg0: i32, %arg1: i32) -> (i32, i32) {
    %c0_i32 = arith.constant 0 : i32
    %c0_i32_0 = arith.constant 0 : i32
    return %c0_i32, %arg0 : i32, i32
  }
  func.func @transform_4(%arg0: i32, %arg1: i32) -> (i32, i32, i32) {
    %c0_i32 = arith.constant 0 : i32
    %c0_i32_0 = arith.constant 0 : i32
    %c0_i32_1 = arith.constant 0 : i32
    return %arg0, %c0_i32, %c0_i32_0 : i32, i32, i32
  }
}

</mosaic_0001>

<llo_original>
// kernel: gcn_forward.3
$region0: #{gcn_forward.3}
  #allocation0 [shape = 'u32[]', space=smem, size = 0x4, offset = 0x4, fixed_abs, tag = 'smem constant byte address 0x4 - core index']
  #allocation1 [shape = 'u32[144,128]{1,0:T(1,128)}', space=vmem, size = 0x12000, scoped, tag = 'internal scratch']
  %s0 = inlined_call_operand.vmem [shape: bf16[128,128], index: 0, kind: input, shape index: {}]
  %s1 = inlined_call_operand.vmem [shape: bf16[128,128], index: 1, kind: input, shape index: {}]
  %s2 = inlined_call_operand.vmem [shape: bf16[128,128], index: 2, kind: output, shape index: {}]
  %s3 = sld [smem:[#allocation0]]
  $region18: #{gcn_forward.3} parent=0
    _
  %s5 = ssub.s32 1, %s3
  %s6 = scalar_select 0, %s5, %s3
  // Predicated region
  $region2: #{gcn_forward.3} parent=0 // pred_check
    _
  $region3: #{gcn_forward.3} parent=0 // pred_check_branch
    %8 = sbr.rel (0) target = $region5
  $region4: #{gcn_forward.3} parent=0 // pred_region
    _
  $region5: #{gcn_forward.3} parent=0 // pred_fallthru
    _
  // Predicated region
  $region6: #{gcn_forward.3} parent=0 // pred_check
    _
  $region7: #{gcn_forward.3} parent=0 // pred_check_branch
    %10 = sbr.rel (0) target = $region9
  $region8: #{gcn_forward.3} parent=0 // pred_region
    _
  $region9: #{gcn_forward.3} parent=0 // pred_fallthru
    _
  %v12 = vld [vmem:[%s0] sm:$0xf]
  %v13 = vld [vmem:[%s0 + $0x4] sm:$0xf]
  %v14 = vld [vmem:[%s0 + $0x8] sm:$0xf]
  %v15 = vld [vmem:[%s0 + $0xc] sm:$0xf]
  %v16 = vld [vmem:[%s0 + $0x10] sm:$0xf]
  %v17 = vld [vmem:[%s0 + $0x14] sm:$0xf]
  %v18 = vld [vmem:[%s0 + $0x18] sm:$0xf]
  %v19 = vld [vmem:[%s0 + $0x1c] sm:$0xf]
  %v20 = vld [vmem:[%s0 + $0x20] sm:$0xf]
  %v21 = vld [vmem:[%s0 + $0x24] sm:$0xf]
  %v22 = vld [vmem:[%s0 + $0x28] sm:$0xf]
  %v23 = vld [vmem:[%s0 + $0x2c] sm:$0xf]
  %v24 = vld [vmem:[%s0 + $0x30] sm:$0xf]
  %v25 = vld [vmem:[%s0 + $0x34] sm:$0xf]
  %v26 = vld [vmem:[%s0 + $0x38] sm:$0xf]
  %v27 = vld [vmem:[%s0 + $0x3c] sm:$0xf]
  %v28 = vld [vmem:[%s1] sm:$0xf]
  %v29 = vld [vmem:[%s1 + $0x4] sm:$0xf]
  %v30 = vld [vmem:[%s1 + $0x8] sm:$0xf]
  %v31 = vld [vmem:[%s1 + $0xc] sm:$0xf]
  %v32 = vld [vmem:[%s1 + $0x10] sm:$0xf]
  %v33 = vld [vmem:[%s1 + $0x14] sm:$0xf]
  %v34 = vld [vmem:[%s1 + $0x18] sm:$0xf]
  %v35 = vld [vmem:[%s1 + $0x1c] sm:$0xf]
  %v36 = vld [vmem:[%s1 + $0x20] sm:$0xf]
  %v37 = vld [vmem:[%s1 + $0x24] sm:$0xf]
  %v38 = vld [vmem:[%s1 + $0x28] sm:$0xf]
  %v39 = vld [vmem:[%s1 + $0x2c] sm:$0xf]
  %v40 = vld [vmem:[%s1 + $0x30] sm:$0xf]
  %v41 = vld [vmem:[%s1 + $0x34] sm:$0xf]
  %v42 = vld [vmem:[%s1 + $0x38] sm:$0xf]
  %v43 = vld [vmem:[%s1 + $0x3c] sm:$0xf]
  %v60 = vunpack.c.l.b16 %v12
  %v61 = vunpack.c.l.b16 %v13
  %v62 = vunpack.c.l.b16 %v14
  %v63 = vunpack.c.l.b16 %v15
  %v64 = vunpack.c.l.b16 %v16
  %v65 = vunpack.c.l.b16 %v17
  %v66 = vunpack.c.l.b16 %v18
  %v67 = vunpack.c.l.b16 %v19
  %v68 = vunpack.c.l.b16 %v20
  %v69 = vunpack.c.l.b16 %v21
  %v70 = vunpack.c.l.b16 %v22
  %v71 = vunpack.c.l.b16 %v23
  %v72 = vunpack.c.l.b16 %v24
  %v73 = vunpack.c.l.b16 %v25
  %v74 = vunpack.c.l.b16 %v26
  %v75 = vunpack.c.l.b16 %v27
  %v76 = vpack.c.b16 %v61, %v60
  %v77 = vpack.c.b16 %v63, %v62
  %v78 = vpack.c.b16 %v65, %v64
  %v79 = vpack.c.b16 %v67, %v66
  %v80 = vpack.c.b16 %v69, %v68
  %v81 = vpack.c.b16 %v71, %v70
  %v82 = vpack.c.b16 %v73, %v72
  %v83 = vpack.c.b16 %v75, %v74
  %v108 = vunpack.c.l.b16 %v28
  %v109 = vunpack.c.l.b16 %v29
  %v110 = vunpack.c.l.b16 %v30
  %v111 = vunpack.c.l.b16 %v31
  %v112 = vunpack.c.l.b16 %v32
  %v113 = vunpack.c.l.b16 %v33
  %v114 = vunpack.c.l.b16 %v34
  %v115 = vunpack.c.l.b16 %v35
  %v116 = vunpack.c.l.b16 %v36
  %v117 = vunpack.c.l.b16 %v37
  %v118 = vunpack.c.l.b16 %v38
  %v119 = vunpack.c.l.b16 %v39
  %v120 = vunpack.c.l.b16 %v40
  %v121 = vunpack.c.l.b16 %v41
  %v122 = vunpack.c.l.b16 %v42
  %v123 = vunpack.c.l.b16 %v43
  %v124 = vpack.c.b16 %v109, %v108
  %v125 = vpack.c.b16 %v111, %v110
  %v126 = vpack.c.b16 %v113, %v112
  %v127 = vpack.c.b16 %v115, %v114
  %v128 = vpack.c.b16 %v117, %v116
  %v129 = vpack.c.b16 %v119, %v118
  %v130 = vpack.c.b16 %v121, %v120
  %v131 = vpack.c.b16 %v123, %v122
  %140 = vmatprep.subr.bf16.mxu0 0
  %141 = vmatpush1.bf16.msra.mxu0 %v131
  %142 = vmatprep.subr.bf16.mxu0 0
  %143 = vmatpush1.bf16.msra.mxu0 %v130
  %144 = vmatprep.subr.bf16.mxu0 0
  %145 = vmatpush1.bf16.msra.mxu0 %v129
  %146 = vmatprep.subr.bf16.mxu0 0
  %147 = vmatpush1.bf16.msra.mxu0 %v128
  %148 = vmatprep.subr.bf16.mxu0 0
  %149 = vmatpush1.bf16.msra.mxu0 %v127
  %150 = vmatprep.subr.bf16.mxu0 0
  %151 = vmatpush1.bf16.msra.mxu0 %v126
  %152 = vmatprep.subr.bf16.mxu0 0
  %153 = vmatpush1.bf16.msra.mxu0 %v125
  %154 = vmatprep.subr.bf16.mxu0 0
  %155 = vmatpush1.bf16.msra.mxu0 %v124
  %156 = vmatprep.subr.bf16.mxu0 0
  %157 = vmatpush2.bf16.msra.mxu0 0
  %158 = vmatprep.subr.bf16.mxu0 0
  %159 = vmatpush2.bf16.msra.mxu0 0
  %160 = vmatprep.subr.bf16.mxu0 0
  %161 = vmatpush2.bf16.msra.mxu0 0
  %162 = vmatprep.subr.bf16.mxu0 0
  %163 = vmatpush2.bf16.msra.mxu0 0
  %164 = vmatprep.subr.bf16.mxu0 0
  %165 = vmatpush2.bf16.msra.mxu0 0
  %166 = vmatprep.subr.bf16.mxu0 0
  %167 = vmatpush2.bf16.msra.mxu0 0
  %168 = vmatprep.subr.bf16.mxu0 0
  %169 = vmatpush2.bf16.msra.mxu0 0
  %170 = vmatprep.subr.bf16.mxu0 0
  %171 = vmatpush2.bf16.msra.mxu0 0
  %172 = vmatprep.mubr.bf16.mxu0 0
  %173 = vmatmul.mubr.bf16.gmra.mxu0 %v76
  %v174 = vpop.f32.mrf.mxu0
  %v175 = vadd.f32 0.0, %v174
  %v176 = vpop.f32.mrf.mxu0
  %v177 = vpop.f32.mrf.mxu0
  %v178 = vadd.f32 0.0, %v177
  %v179 = vpop.f32.mrf.mxu0
  %180 = vmatprep.mubr.bf16.mxu0 0
  %181 = vmatmul.mubr.bf16.gmra.mxu0 %v77
  %v182 = vpop.f32.mrf.mxu0
  %v183 = vadd.f32 0.0, %v182
  %v184 = vpop.f32.mrf.mxu0
  %v185 = vpop.f32.mrf.mxu0
  %v186 = vadd.f32 0.0, %v185
  %v187 = vpop.f32.mrf.mxu0
  %188 = vmatprep.mubr.bf16.mxu0 0
  %189 = vmatmul.mubr.bf16.gmra.mxu0 %v78
  %v190 = vpop.f32.mrf.mxu0
  %v191 = vadd.f32 0.0, %v190
  %v192 = vpop.f32.mrf.mxu0
  %v193 = vpop.f32.mrf.mxu0
  %v194 = vadd.f32 0.0, %v193
  %v195 = vpop.f32.mrf.mxu0
  %196 = vmatprep.mubr.bf16.mxu0 0
  %197 = vmatmul.mubr.bf16.gmra.mxu0 %v79
  %v198 = vpop.f32.mrf.mxu0
  %v199 = vadd.f32 0.0, %v198
  %v200 = vpop.f32.mrf.mxu0
  %v201 = vpop.f32.mrf.mxu0
  %v202 = vadd.f32 0.0, %v201
  %v203 = vpop.f32.mrf.mxu0
  %204 = vmatprep.mubr.bf16.mxu0 0
  %205 = vmatmul.mubr.bf16.gmra.mxu0 %v80
  %v206 = vpop.f32.mrf.mxu0
  %v207 = vadd.f32 0.0, %v206
  %v208 = vpop.f32.mrf.mxu0
  %v209 = vpop.f32.mrf.mxu0
  %v210 = vadd.f32 0.0, %v209
  %v211 = vpop.f32.mrf.mxu0
  %212 = vmatprep.mubr.bf16.mxu0 0
  %213 = vmatmul.mubr.bf16.gmra.mxu0 %v81
  %v214 = vpop.f32.mrf.mxu0
  %v215 = vadd.f32 0.0, %v214
  %v216 = vpop.f32.mrf.mxu0
  %v217 = vpop.f32.mrf.mxu0
  %v218 = vadd.f32 0.0, %v217
  %v219 = vpop.f32.mrf.mxu0
  %220 = vmatprep.mubr.bf16.mxu0 0
  %221 = vmatmul.mubr.bf16.gmra.mxu0 %v82
  %v222 = vpop.f32.mrf.mxu0
  %v223 = vadd.f32 0.0, %v222
  %v224 = vpop.f32.mrf.mxu0
  %v225 = vpop.f32.mrf.mxu0
  %v226 = vadd.f32 0.0, %v225
  %v227 = vpop.f32.mrf.mxu0
  %228 = vmatprep.mubr.bf16.mxu0 0
  %229 = vmatmul.mubr.bf16.gmra.mxu0 %v83
  %v230 = vpop.f32.mrf.mxu0
  %v231 = vadd.f32 0.0, %v230
  %v232 = vpop.f32.mrf.mxu0
  %v233 = vpop.f32.mrf.mxu0
  %v234 = vadd.f32 0.0, %v233
  %v235 = vpop.f32.mrf.mxu0
  %236 = vdwg.mxu0
  %v237 = vpack.c.bf16 %v178, %v175
  %v238 = vpack.c.bf16 %v186, %v183
  %v239 = vpack.c.bf16 %v194, %v191
  %v240 = vpack.c.bf16 %v202, %v199
  %v241 = vpack.c.bf16 %v210, %v207
  %v242 = vpack.c.bf16 %v218, %v215
  %v243 = vpack.c.bf16 %v226, %v223
  %v244 = vpack.c.bf16 %v234, %v231
  %v253 = vunpack.c.l.b16 %v237
  %v254 = vunpack.c.h.b16 %v237
  %v255 = vunpack.c.l.b16 %v238
  %v256 = vunpack.c.h.b16 %v238
  %v257 = vunpack.c.l.b16 %v239
  %v258 = vunpack.c.h.b16 %v239
  %v259 = vunpack.c.l.b16 %v240
  %v260 = vunpack.c.h.b16 %v240
  %v261 = vunpack.c.l.b16 %v241
  %v262 = vunpack.c.h.b16 %v241
  %v263 = vunpack.c.l.b16 %v242
  %v264 = vunpack.c.h.b16 %v242
  %v265 = vunpack.c.l.b16 %v243
  %v266 = vunpack.c.h.b16 %v243
  %v267 = vunpack.c.l.b16 %v244
  %v268 = vunpack.c.h.b16 %v244
  %v269 = vpack.c.b16 %v253, %v253
  %v270 = vpack.c.b16 %v254, %v254
  %v271 = vpack.c.b16 %v255, %v255
  %v272 = vpack.c.b16 %v256, %v256
  %v273 = vpack.c.b16 %v257, %v257
  %v274 = vpack.c.b16 %v258, %v258
  %v275 = vpack.c.b16 %v259, %v259
  %v276 = vpack.c.b16 %v260, %v260
  %v277 = vpack.c.b16 %v261, %v261
  %v278 = vpack.c.b16 %v262, %v262
  %v279 = vpack.c.b16 %v263, %v263
  %v280 = vpack.c.b16 %v264, %v264
  %v281 = vpack.c.b16 %v265, %v265
  %v282 = vpack.c.b16 %v266, %v266
  %v283 = vpack.c.b16 %v267, %v267
  %v284 = vpack.c.b16 %v268, %v268
  %301 = vst [vmem:[%s2] sm:$0xf] %v269
  %302 = vst [vmem:[%s2 + $0x4] sm:$0xf] %v270
  %303 = vst [vmem:[%s2 + $0x8] sm:$0xf] %v271
  %304 = vst [vmem:[%s2 + $0xc] sm:$0xf] %v272
  %305 = vst [vmem:[%s2 + $0x10] sm:$0xf] %v273
  %306 = vst [vmem:[%s2 + $0x14] sm:$0xf] %v274
  %307 = vst [vmem:[%s2 + $0x18] sm:$0xf] %v275
  %308 = vst [vmem:[%s2 + $0x1c] sm:$0xf] %v276
  %309 = vst [vmem:[%s2 + $0x20] sm:$0xf] %v277
  %310 = vst [vmem:[%s2 + $0x24] sm:$0xf] %v278
  %311 = vst [vmem:[%s2 + $0x28] sm:$0xf] %v279
  %312 = vst [vmem:[%s2 + $0x2c] sm:$0xf] %v280
  %313 = vst [vmem:[%s2 + $0x30] sm:$0xf] %v281
  %314 = vst [vmem:[%s2 + $0x34] sm:$0xf] %v282
  %315 = vst [vmem:[%s2 + $0x38] sm:$0xf] %v283
  %316 = vst [vmem:[%s2 + $0x3c] sm:$0xf] %v284
  // Predicated region
  $region10: #{gcn_forward.3} parent=0 // pred_check
    _
  $region11: #{gcn_forward.3} parent=0 // pred_check_branch
    %318 = sbr.rel (0) target = $region13
  $region12: #{gcn_forward.3} parent=0 // pred_region
    _
  $region13: #{gcn_forward.3} parent=0 // pred_fallthru
    _
  // Predicated region
  $region14: #{gcn_forward.3} parent=0 // pred_check
    _
  $region15: #{gcn_forward.3} parent=0 // pred_check_branch
    %320 = sbr.rel (0) target = $region17
  $region16: #{gcn_forward.3} parent=0 // pred_region
    _
  $region17: #{gcn_forward.3} parent=0 // pred_fallthru
    _

// kernel: gcn_forward.5
$region0: #{gcn_forward.5}
  #allocation0 [shape = 'u32[]', space=smem, size = 0x4, offset = 0x4, fixed_abs, tag = 'smem constant byte address 0x4 - core index']
  #allocation1 [shape = 'u32[144,128]{1,0:T(1,128)}', space=vmem, size = 0x12000, scoped, tag = 'internal scratch']
  #allocation2 [shape = 'f32[128,128]{1,0:T(8,128)}', space=vmem, size = 0x10000, scoped, tag = 'scratch operand']
  %s0 = inlined_call_operand.vmem [shape: bf16[128,128], index: 0, kind: input, shape index: {}]
  %s1 = inlined_call_operand.vmem [shape: bf16[128,128], index: 1, kind: input, shape index: {}]
  %s2 = inlined_call_operand.vmem [shape: f32[1,128], index: 2, kind: input, shape index: {}]
  %s3 = inlined_call_operand.vmem [shape: bf16[8,128], index: 3, kind: input, shape index: {}]
  %s4 = inlined_call_operand.vmem [shape: f32[1,8,128], index: 4, kind: output, shape index: {}]
  %s5 = sld [smem:[#allocation0]]
  $region34: #{gcn_forward.5} parent=0
    _
  %s7 = ssub.s32 1, %s5
  %s8 = scalar_select 0, %s7, %s5
  // Predicated region
  $region2: #{gcn_forward.5} parent=0 // pred_check
    _
  $region3: #{gcn_forward.5} parent=0 // pred_check_branch
    %10 = sbr.rel (0) target = $region5
  $region4: #{gcn_forward.5} parent=0 // pred_region
    _
  $region5: #{gcn_forward.5} parent=0 // pred_fallthru
    _
  // Predicated region
  $region6: #{gcn_forward.5} parent=0 // pred_check
    _
  $region7: #{gcn_forward.5} parent=0 // pred_check_branch
    %12 = sbr.rel (0) target = $region9
  $region8: #{gcn_forward.5} parent=0 // pred_region
    _
  $region9: #{gcn_forward.5} parent=0 // pred_fallthru
    _
  // Predicated region
  $region10: #{gcn_forward.5} parent=0 // pred_check
    _
  $region11: #{gcn_forward.5} parent=0 // pred_check_branch
    %14 = sbr.rel (0) target = $region13
  $region12: #{gcn_forward.5} parent=0 // pred_region
    _
  $region13: #{gcn_forward.5} parent=0 // pred_fallthru
    _
  // Predicated region
  $region14: #{gcn_forward.5} parent=0 // pred_check
    _
  $region15: #{gcn_forward.5} parent=0 // pred_check_branch
    %16 = sbr.rel (0) target = $region17
  $region16: #{gcn_forward.5} parent=0 // pred_region
    _
  $region17: #{gcn_forward.5} parent=0 // pred_fallthru
    _
  %p18 = scmp.eq.s32.totalorder 0, 0
  // Predicated region
  $region18: #{gcn_forward.5} parent=0 // pred_check
    %p19 = pneg %p18
  $region19: #{gcn_forward.5} parent=0 // pred_check_branch
    %21 = sbr.rel (%p19) target = $region21
  $region20: #{gcn_forward.5} parent=0 // pred_region
    %22 = vst [vmem:[#allocation2] sm:$0xff] 0.0
    %23 = vst [vmem:[#allocation2 + $0x8] sm:$0xff] 0.0
    %24 = vst [vmem:[#allocation2 + $0x10] sm:$0xff] 0.0
    %25 = vst [vmem:[#allocation2 + $0x18] sm:$0xff] 0.0
    %26 = vst [vmem:[#allocation2 + $0x20] sm:$0xff] 0.0
    %27 = vst [vmem:[#allocation2 + $0x28] sm:$0xff] 0.0
    %28 = vst [vmem:[#allocation2 + $0x30] sm:$0xff] 0.0
    %29 = vst [vmem:[#allocation2 + $0x38] sm:$0xff] 0.0
    %30 = vst [vmem:[#allocation2 + $0x40] sm:$0xff] 0.0
    %31 = vst [vmem:[#allocation2 + $0x48] sm:$0xff] 0.0
    %32 = vst [vmem:[#allocation2 + $0x50] sm:$0xff] 0.0
    %33 = vst [vmem:[#allocation2 + $0x58] sm:$0xff] 0.0
    %34 = vst [vmem:[#allocation2 + $0x60] sm:$0xff] 0.0
    %35 = vst [vmem:[#allocation2 + $0x68] sm:$0xff] 0.0
    %36 = vst [vmem:[#allocation2 + $0x70] sm:$0xff] 0.0
    %37 = vst [vmem:[#allocation2 + $0x78] sm:$0xff] 0.0
  $region21: #{gcn_forward.5} parent=0 // pred_fallthru
    _
  %v38 = vld [vmem:[#allocation2] sm:$0xff]
  %v39 = vld [vmem:[#allocation2 + $0x8] sm:$0xff]
  %v40 = vld [vmem:[#allocation2 + $0x10] sm:$0xff]
  %v41 = vld [vmem:[#allocation2 + $0x18] sm:$0xff]
  %v42 = vld [vmem:[#allocation2 + $0x20] sm:$0xff]
  %v43 = vld [vmem:[#allocation2 + $0x28] sm:$0xff]
  %v44 = vld [vmem:[#allocation2 + $0x30] sm:$0xff]
  %v45 = vld [vmem:[#allocation2 + $0x38] sm:$0xff]
  %v46 = vld [vmem:[#allocation2 + $0x40] sm:$0xff]
  %v47 = vld [vmem:[#allocation2 + $0x48] sm:$0xff]
  %v48 = vld [vmem:[#allocation2 + $0x50] sm:$0xff]
  %v49 = vld [vmem:[#allocation2 + $0x58] sm:$0xff]
  %v50 = vld [vmem:[#allocation2 + $0x60] sm:$0xff]
  %v51 = vld [vmem:[#allocation2 + $0x68] sm:$0xff]
  %v52 = vld [vmem:[#allocation2 + $0x70] sm:$0xff]
  %v53 = vld [vmem:[#allocation2 + $0x78] sm:$0xff]
  %v54 = vld [vmem:[%s0] sm:$0xf]
  %v55 = vld [vmem:[%s0 + $0x4] sm:$0xf]
  %v56 = vld [vmem:[%s0 + $0x8] sm:$0xf]
  %v57 = vld [vmem:[%s0 + $0xc] sm:$0xf]
  %v58 = vld [vmem:[%s0 + $0x10] sm:$0xf]
  %v59 = vld [vmem:[%s0 + $0x14] sm:$0xf]
  %v60 = vld [vmem:[%s0 + $0x18] sm:$0xf]
  %v61 = vld [vmem:[%s0 + $0x1c] sm:$0xf]
  %v62 = vld [vmem:[%s0 + $0x20] sm:$0xf]
  %v63 = vld [vmem:[%s0 + $0x24] sm:$0xf]
  %v64 = vld [vmem:[%s0 + $0x28] sm:$0xf]
  %v65 = vld [vmem:[%s0 + $0x2c] sm:$0xf]
  %v66 = vld [vmem:[%s0 + $0x30] sm:$0xf]
  %v67 = vld [vmem:[%s0 + $0x34] sm:$0xf]
  %v68 = vld [vmem:[%s0 + $0x38] sm:$0xf]
  %v69 = vld [vmem:[%s0 + $0x3c] sm:$0xf]
  %v70 = vld [vmem:[%s1] sm:$0xf]
  %v71 = vld [vmem:[%s1 + $0x4] sm:$0xf]
  %v72 = vld [vmem:[%s1 + $0x8] sm:$0xf]
  %v73 = vld [vmem:[%s1 + $0xc] sm:$0xf]
  %v74 = vld [vmem:[%s1 + $0x10] sm:$0xf]
  %v75 = vld [vmem:[%s1 + $0x14] sm:$0xf]
  %v76 = vld [vmem:[%s1 + $0x18] sm:$0xf]
  %v77 = vld [vmem:[%s1 + $0x1c] sm:$0xf]
  %v78 = vld [vmem:[%s1 + $0x20] sm:$0xf]
  %v79 = vld [vmem:[%s1 + $0x24] sm:$0xf]
  %v80 = vld [vmem:[%s1 + $0x28] sm:$0xf]
  %v81 = vld [vmem:[%s1 + $0x2c] sm:$0xf]
  %v82 = vld [vmem:[%s1 + $0x30] sm:$0xf]
  %v83 = vld [vmem:[%s1 + $0x34] sm:$0xf]
  %v84 = vld [vmem:[%s1 + $0x38] sm:$0xf]
  %v85 = vld [vmem:[%s1 + $0x3c] sm:$0xf]
  %v102 = vunpack.c.l.b16 %v54
  %v103 = vunpack.c.l.b16 %v55
  %v104 = vunpack.c.l.b16 %v56
  %v105 = vunpack.c.l.b16 %v57
  %v106 = vunpack.c.l.b16 %v58
  %v107 = vunpack.c.l.b16 %v59
  %v108 = vunpack.c.l.b16 %v60
  %v109 = vunpack.c.l.b16 %v61
  %v110 = vunpack.c.l.b16 %v62
  %v111 = vunpack.c.l.b16 %v63
  %v112 = vunpack.c.l.b16 %v64
  %v113 = vunpack.c.l.b16 %v65
  %v114 = vunpack.c.l.b16 %v66
  %v115 = vunpack.c.l.b16 %v67
  %v116 = vunpack.c.l.b16 %v68
  %v117 = vunpack.c.l.b16 %v69
  %v118 = vpack.c.b16 %v103, %v102
  %v119 = vpack.c.b16 %v105, %v104
  %v120 = vpack.c.b16 %v107, %v106
  %v121 = vpack.c.b16 %v109, %v108
  %v122 = vpack.c.b16 %v111, %v110
  %v123 = vpack.c.b16 %v113, %v112
  %v124 = vpack.c.b16 %v115, %v114
  %v125 = vpack.c.b16 %v117, %v116
  %v150 = vunpack.c.l.b16 %v70
  %v151 = vunpack.c.l.b16 %v71
  %v152 = vunpack.c.l.b16 %v72
  %v153 = vunpack.c.l.b16 %v73
  %v154 = vunpack.c.l.b16 %v74
  %v155 = vunpack.c.l.b16 %v75
  %v156 = vunpack.c.l.b16 %v76
  %v157 = vunpack.c.l.b16 %v77
  %v158 = vunpack.c.l.b16 %v78
  %v159 = vunpack.c.l.b16 %v79
  %v160 = vunpack.c.l.b16 %v80
  %v161 = vunpack.c.l.b16 %v81
  %v162 = vunpack.c.l.b16 %v82
  %v163 = vunpack.c.l.b16 %v83
  %v164 = vunpack.c.l.b16 %v84
  %v165 = vunpack.c.l.b16 %v85
  %v166 = vpack.c.b16 %v151, %v150
  %v167 = vpack.c.b16 %v153, %v152
  %v168 = vpack.c.b16 %v155, %v154
  %v169 = vpack.c.b16 %v157, %v156
  %v170 = vpack.c.b16 %v159, %v158
  %v171 = vpack.c.b16 %v161, %v160
  %v172 = vpack.c.b16 %v163, %v162
  %v173 = vpack.c.b16 %v165, %v164
  %182 = vmatprep.subr.bf16.mxu0 0
  %183 = vmatpush1.bf16.msra.mxu0 %v173
  %184 = vmatprep.subr.bf16.mxu0 0
  %185 = vmatpush1.bf16.msra.mxu0 %v172
  %186 = vmatprep.subr.bf16.mxu0 0
  %187 = vmatpush1.bf16.msra.mxu0 %v171
  %188 = vmatprep.subr.bf16.mxu0 0
  %189 = vmatpush1.bf16.msra.mxu0 %v170
  %190 = vmatprep.subr.bf16.mxu0 0
  %191 = vmatpush1.bf16.msra.mxu0 %v169
  %192 = vmatprep.subr.bf16.mxu0 0
  %193 = vmatpush1.bf16.msra.mxu0 %v168
  %194 = vmatprep.subr.bf16.mxu0 0
  %195 = vmatpush1.bf16.msra.mxu0 %v167
  %196 = vmatprep.subr.bf16.mxu0 0
  %197 = vmatpush1.bf16.msra.mxu0 %v166
  %198 = vmatprep.subr.bf16.mxu0 0
  %199 = vmatpush2.bf16.msra.mxu0 0
  %200 = vmatprep.subr.bf16.mxu0 0
  %201 = vmatpush2.bf16.msra.mxu0 0
  %202 = vmatprep.subr.bf16.mxu0 0
  %203 = vmatpush2.bf16.msra.mxu0 0
  %204 = vmatprep.subr.bf16.mxu0 0
  %205 = vmatpush2.bf16.msra.mxu0 0
  %206 = vmatprep.subr.bf16.mxu0 0
  %207 = vmatpush2.bf16.msra.mxu0 0
  %208 = vmatprep.subr.bf16.mxu0 0
  %209 = vmatpush2.bf16.msra.mxu0 0
  %210 = vmatprep.subr.bf16.mxu0 0
  %211 = vmatpush2.bf16.msra.mxu0 0
  %212 = vmatprep.subr.bf16.mxu0 0
  %213 = vmatpush2.bf16.msra.mxu0 0
  %214 = vmatprep.mubr.bf16.mxu0 0
  %215 = vmatmul.mubr.bf16.gmra.mxu0 %v118
  %v216 = vpop.f32.mrf.mxu0
  %v217 = vadd.f32 0.0, %v216
  %v218 = vpop.f32.mrf.mxu0
  %v219 = vpop.f32.mrf.mxu0
  %v220 = vadd.f32 0.0, %v219
  %v221 = vpop.f32.mrf.mxu0
  %222 = vmatprep.mubr.bf16.mxu0 0
  %223 = vmatmul.mubr.bf16.gmra.mxu0 %v119
  %v224 = vpop.f32.mrf.mxu0
  %v225 = vadd.f32 0.0, %v224
  %v226 = vpop.f32.mrf.mxu0
  %v227 = vpop.f32.mrf.mxu0
  %v228 = vadd.f32 0.0, %v227
  %v229 = vpop.f32.mrf.mxu0
  %230 = vmatprep.mubr.bf16.mxu0 0
  %231 = vmatmul.mubr.bf16.gmra.mxu0 %v120
  %v232 = vpop.f32.mrf.mxu0
  %v233 = vadd.f32 0.0, %v232
  %v234 = vpop.f32.mrf.mxu0
  %v235 = vpop.f32.mrf.mxu0
  %v236 = vadd.f32 0.0, %v235
  %v237 = vpop.f32.mrf.mxu0
  %238 = vmatprep.mubr.bf16.mxu0 0
  %239 = vmatmul.mubr.bf16.gmra.mxu0 %v121
  %v240 = vpop.f32.mrf.mxu0
  %v241 = vadd.f32 0.0, %v240
  %v242 = vpop.f32.mrf.mxu0
  %v243 = vpop.f32.mrf.mxu0
  %v244 = vadd.f32 0.0, %v243
  %v245 = vpop.f32.mrf.mxu0
  %246 = vmatprep.mubr.bf16.mxu0 0
  %247 = vmatmul.mubr.bf16.gmra.mxu0 %v122
  %v248 = vpop.f32.mrf.mxu0
  %v249 = vadd.f32 0.0, %v248
  %v250 = vpop.f32.mrf.mxu0
  %v251 = vpop.f32.mrf.mxu0
  %v252 = vadd.f32 0.0, %v251
  %v253 = vpop.f32.mrf.mxu0
  %254 = vmatprep.mubr.bf16.mxu0 0
  %255 = vmatmul.mubr.bf16.gmra.mxu0 %v123
  %v256 = vpop.f32.mrf.mxu0
  %v257 = vadd.f32 0.0, %v256
  %v258 = vpop.f32.mrf.mxu0
  %v259 = vpop.f32.mrf.mxu0
  %v260 = vadd.f32 0.0, %v259
  %v261 = vpop.f32.mrf.mxu0
  %262 = vmatprep.mubr.bf16.mxu0 0
  %263 = vmatmul.mubr.bf16.gmra.mxu0 %v124
  %v264 = vpop.f32.mrf.mxu0
  %v265 = vadd.f32 0.0, %v264
  %v266 = vpop.f32.mrf.mxu0
  %v267 = vpop.f32.mrf.mxu0
  %v268 = vadd.f32 0.0, %v267
  %v269 = vpop.f32.mrf.mxu0
  %270 = vmatprep.mubr.bf16.mxu0 0
  %271 = vmatmul.mubr.bf16.gmra.mxu0 %v125
  %v272 = vpop.f32.mrf.mxu0
  %v273 = vadd.f32 0.0, %v272
  %v274 = vpop.f32.mrf.mxu0
  %v275 = vpop.f32.mrf.mxu0
  %v276 = vadd.f32 0.0, %v275
  %v277 = vpop.f32.mrf.mxu0
  %278 = vdwg.mxu0
  %v279 = vadd.f32 %v38, %v217
  %v280 = vadd.f32 %v39, %v220
  %v281 = vadd.f32 %v40, %v225
  %v282 = vadd.f32 %v41, %v228
  %v283 = vadd.f32 %v42, %v233
  %v284 = vadd.f32 %v43, %v236
  %v285 = vadd.f32 %v44, %v241
  %v286 = vadd.f32 %v45, %v244
  %v287 = vadd.f32 %v46, %v249
  %v288 = vadd.f32 %v47, %v252
  %v289 = vadd.f32 %v48, %v257
  %v290 = vadd.f32 %v49, %v260
  %v291 = vadd.f32 %v50, %v265
  %v292 = vadd.f32 %v51, %v268
  %v293 = vadd.f32 %v52, %v273
  %v294 = vadd.f32 %v53, %v276
  %295 = vst [vmem:[#allocation2] sm:$0xff] %v279
  %296 = vst [vmem:[#allocation2 + $0x8] sm:$0xff] %v280
  %297 = vst [vmem:[#allocation2 + $0x10] sm:$0xff] %v281
  %298 = vst [vmem:[#allocation2 + $0x18] sm:$0xff] %v282
  %299 = vst [vmem:[#allocation2 + $0x20] sm:$0xff] %v283
  %300 = vst [vmem:[#allocation2 + $0x28] sm:$0xff] %v284
  %301 = vst [vmem:[#allocation2 + $0x30] sm:$0xff] %v285
  %302 = vst [vmem:[#allocation2 + $0x38] sm:$0xff] %v286
  %303 = vst [vmem:[#allocation2 + $0x40] sm:$0xff] %v287
  %304 = vst [vmem:[#allocation2 + $0x48] sm:$0xff] %v288
  %305 = vst [vmem:[#allocation2 + $0x50] sm:$0xff] %v289
  %306 = vst [vmem:[#allocation2 + $0x58] sm:$0xff] %v290
  %307 = vst [vmem:[#allocation2 + $0x60] sm:$0xff] %v291
  %308 = vst [vmem:[#allocation2 + $0x68] sm:$0xff] %v292
  %309 = vst [vmem:[#allocation2 + $0x70] sm:$0xff] %v293
  %310 = vst [vmem:[#allocation2 + $0x78] sm:$0xff] %v294
  // Predicated region
  $region22: #{gcn_forward.5} parent=0 // pred_check
    %p311 = pneg %p18
  $region23: #{gcn_forward.5} parent=0 // pred_check_branch
    %313 = sbr.rel (%p311) target = $region25
  $region24: #{gcn_forward.5} parent=0 // pred_region
    %v314 = vld [vmem:[#allocation2] sm:$0xff]
    %v315 = vld [vmem:[#allocation2 + $0x8] sm:$0xff]
    %v316 = vld [vmem:[#allocation2 + $0x10] sm:$0xff]
    %v317 = vld [vmem:[#allocation2 + $0x18] sm:$0xff]
    %v318 = vld [vmem:[#allocation2 + $0x20] sm:$0xff]
    %v319 = vld [vmem:[#allocation2 + $0x28] sm:$0xff]
    %v320 = vld [vmem:[#allocation2 + $0x30] sm:$0xff]
    %v321 = vld [vmem:[#allocation2 + $0x38] sm:$0xff]
    %v322 = vld [vmem:[#allocation2 + $0x40] sm:$0xff]
    %v323 = vld [vmem:[#allocation2 + $0x48] sm:$0xff]
    %v324 = vld [vmem:[#allocation2 + $0x50] sm:$0xff]
    %v325 = vld [vmem:[#allocation2 + $0x58] sm:$0xff]
    %v326 = vld [vmem:[#allocation2 + $0x60] sm:$0xff]
    %v327 = vld [vmem:[#allocation2 + $0x68] sm:$0xff]
    %v328 = vld [vmem:[#allocation2 + $0x70] sm:$0xff]
    %v329 = vld [vmem:[#allocation2 + $0x78] sm:$0xff]
    %v330 = vld [vmem:[%s2] sm:$0x1]
    %v332 = vlaneseq
    %v333 = vshrl.u32 %v332, 7
    %v334 = vsub.s32 0, %v333
    %v335 = vrot.slane %v330, %v334
    %v337 = vadd.f32 %v314, %v335
    %v338 = vadd.f32 %v315, %v335
    %v339 = vadd.f32 %v316, %v335
    %v340 = vadd.f32 %v317, %v335
    %v341 = vadd.f32 %v318, %v335
    %v342 = vadd.f32 %v319, %v335
    %v343 = vadd.f32 %v320, %v335
    %v344 = vadd.f32 %v321, %v335
    %v345 = vadd.f32 %v322, %v335
    %v346 = vadd.f32 %v323, %v335
    %v347 = vadd.f32 %v324, %v335
    %v348 = vadd.f32 %v325, %v335
    %v349 = vadd.f32 %v326, %v335
    %v350 = vadd.f32 %v327, %v335
    %v351 = vadd.f32 %v328, %v335
    %v352 = vadd.f32 %v329, %v335
    %v353 = vmax.f32 %v337, 0.0
    %v354 = vmax.f32 %v338, 0.0
    %v355 = vmax.f32 %v339, 0.0
    %v356 = vmax.f32 %v340, 0.0
    %v357 = vmax.f32 %v341, 0.0
    %v358 = vmax.f32 %v342, 0.0
    %v359 = vmax.f32 %v343, 0.0
    %v360 = vmax.f32 %v344, 0.0
    %v361 = vmax.f32 %v345, 0.0
    %v362 = vmax.f32 %v346, 0.0
    %v363 = vmax.f32 %v347, 0.0
    %v364 = vmax.f32 %v348, 0.0
    %v365 = vmax.f32 %v349, 0.0
    %v366 = vmax.f32 %v350, 0.0
    %v367 = vmax.f32 %v351, 0.0
    %v368 = vmax.f32 %v352, 0.0
    %v369 = vpack.c.bf16 %v354, %v353
    %v370 = vpack.c.bf16 %v356, %v355
    %v371 = vpack.c.bf16 %v358, %v357
    %v372 = vpack.c.bf16 %v360, %v359
    %v373 = vpack.c.bf16 %v362, %v361
    %v374 = vpack.c.bf16 %v364, %v363
    %v375 = vpack.c.bf16 %v366, %v365
    %v376 = vpack.c.bf16 %v368, %v367
    %v377 = vld [vmem:[%s3] sm:$0xf]
    %378 = vmatprep.subr.bf16.mxu0 0
    %379 = vmatpush1.bf16.msra.mxu0 %v376
    %380 = vmatprep.subr.bf16.mxu0 0
    %381 = vmatpush1.bf16.msra.mxu0 %v375
    %382 = vmatprep.subr.bf16.mxu0 0
    %383 = vmatpush1.bf16.msra.mxu0 %v374
    %384 = vmatprep.subr.bf16.mxu0 0
    %385 = vmatpush1.bf16.msra.mxu0 %v373
    %386 = vmatprep.subr.bf16.mxu0 0
    %387 = vmatpush1.bf16.msra.mxu0 %v372
    %388 = vmatprep.subr.bf16.mxu0 0
    %389 = vmatpush1.bf16.msra.mxu0 %v371
    %390 = vmatprep.subr.bf16.mxu0 0
    %391 = vmatpush1.bf16.msra.mxu0 %v370
    %392 = vmatprep.subr.bf16.mxu0 0
    %393 = vmatpush1.bf16.msra.mxu0 %v369
    %394 = vmatprep.subr.bf16.mxu0 0
    %395 = vmatpush2.bf16.msra.mxu0 0
    %396 = vmatprep.subr.bf16.mxu0 0
    %397 = vmatpush2.bf16.msra.mxu0 0
    %398 = vmatprep.subr.bf16.mxu0 0
    %399 = vmatpush2.bf16.msra.mxu0 0
    %400 = vmatprep.subr.bf16.mxu0 0
    %401 = vmatpush2.bf16.msra.mxu0 0
    %402 = vmatprep.subr.bf16.mxu0 0
    %403 = vmatpush2.bf16.msra.mxu0 0
    %404 = vmatprep.subr.bf16.mxu0 0
    %405 = vmatpush2.bf16.msra.mxu0 0
    %406 = vmatprep.subr.bf16.mxu0 0
    %407 = vmatpush2.bf16.msra.mxu0 0
    %408 = vmatprep.subr.bf16.mxu0 0
    %409 = vmatpush2.bf16.msra.mxu0 0
    %410 = vmatprep.mubr.bf16.mxu0 0
    %411 = vmatmul.mubr.bf16.gmra.mxu0 %v377
    %v412 = vpop.f32.mrf.mxu0
    %v413 = vadd.f32 0.0, %v412
    %v414 = vpop.f32.mrf.mxu0
    %v415 = vpop.f32.mrf.mxu0
    %v416 = vpop.f32.mrf.mxu0
    %417 = vdwg.mxu0
    %418 = vst [vmem:[%s4] sm:$0xff] %v413
  $region25: #{gcn_forward.5} parent=0 // pred_fallthru
    _
  // Predicated region
  $region26: #{gcn_forward.5} parent=0 // pred_check
    _
  $region27: #{gcn_forward.5} parent=0 // pred_check_branch
    %420 = sbr.rel (0) target = $region29
  $region28: #{gcn_forward.5} parent=0 // pred_region
    _
  $region29: #{gcn_forward.5} parent=0 // pred_fallthru
    _
  // Predicated region
  $region30: #{gcn_forward.5} parent=0 // pred_check
    _
  $region31: #{gcn_forward.5} parent=0 // pred_check_branch
    %422 = sbr.rel (0) target = $region33
  $region32: #{gcn_forward.5} parent=0 // pred_region
    _
  $region33: #{gcn_forward.5} parent=0 // pred_fallthru
    _

// kernel: gcn_forward.4
$region0: #{gcn_forward.4}
  #allocation0 [shape = 'u32[]', space=smem, size = 0x4, offset = 0x4, fixed_abs, tag = 'smem constant byte address 0x4 - core index']
  #allocation1 [shape = 'u32[144,128]{1,0:T(1,128)}', space=vmem, size = 0x12000, scoped, tag = 'internal scratch']
  #allocation2 [shape = 'f32[128,128]{1,0:T(8,128)}', space=vmem, size = 0x10000, scoped, tag = 'scratch operand']
  %s0 = inlined_call_operand.vmem [shape: bf16[128,128], index: 0, kind: input, shape index: {}]
  %s1 = inlined_call_operand.vmem [shape: bf16[128,128], index: 1, kind: input, shape index: {}]
  %s2 = inlined_call_operand.vmem [shape: f32[1,128], index: 2, kind: input, shape index: {}]
  %s3 = inlined_call_operand.vmem [shape: bf16[128,128], index: 3, kind: input, shape index: {}]
  %s4 = inlined_call_operand.vmem [shape: bf16[128,128], index: 4, kind: output, shape index: {}]
  %s5 = sld [smem:[#allocation0]]
  $region34: #{gcn_forward.4} parent=0
    _
  %s7 = ssub.s32 1, %s5
  %s8 = scalar_select 0, %s7, %s5
  // Predicated region
  $region2: #{gcn_forward.4} parent=0 // pred_check
    _
  $region3: #{gcn_forward.4} parent=0 // pred_check_branch
    %10 = sbr.rel (0) target = $region5
  $region4: #{gcn_forward.4} parent=0 // pred_region
    _
  $region5: #{gcn_forward.4} parent=0 // pred_fallthru
    _
  // Predicated region
  $region6: #{gcn_forward.4} parent=0 // pred_check
    _
  $region7: #{gcn_forward.4} parent=0 // pred_check_branch
    %12 = sbr.rel (0) target = $region9
  $region8: #{gcn_forward.4} parent=0 // pred_region
    _
  $region9: #{gcn_forward.4} parent=0 // pred_fallthru
    _
  // Predicated region
  $region10: #{gcn_forward.4} parent=0 // pred_check
    _
  $region11: #{gcn_forward.4} parent=0 // pred_check_branch
    %14 = sbr.rel (0) target = $region13
  $region12: #{gcn_forward.4} parent=0 // pred_region
    _
  $region13: #{gcn_forward.4} parent=0 // pred_fallthru
    _
  // Predicated region
  $region14: #{gcn_forward.4} parent=0 // pred_check
    _
  $region15: #{gcn_forward.4} parent=0 // pred_check_branch
    %16 = sbr.rel (0) target = $region17
  $region16: #{gcn_forward.4} parent=0 // pred_region
    _
  $region17: #{gcn_forward.4} parent=0 // pred_fallthru
    _
  %p18 = scmp.eq.s32.totalorder 0, 0
  // Predicated region
  $region18: #{gcn_forward.4} parent=0 // pred_check
    %p19 = pneg %p18
  $region19: #{gcn_forward.4} parent=0 // pred_check_branch
    %21 = sbr.rel (%p19) target = $region21
  $region20: #{gcn_forward.4} parent=0 // pred_region
    %22 = vst [vmem:[#allocation2] sm:$0xff] 0.0
    %23 = vst [vmem:[#allocation2 + $0x8] sm:$0xff] 0.0
    %24 = vst [vmem:[#allocation2 + $0x10] sm:$0xff] 0.0
    %25 = vst [vmem:[#allocation2 + $0x18] sm:$0xff] 0.0
    %26 = vst [vmem:[#allocation2 + $0x20] sm:$0xff] 0.0
    %27 = vst [vmem:[#allocation2 + $0x28] sm:$0xff] 0.0
    %28 = vst [vmem:[#allocation2 + $0x30] sm:$0xff] 0.0
    %29 = vst [vmem:[#allocation2 + $0x38] sm:$0xff] 0.0
    %30 = vst [vmem:[#allocation2 + $0x40] sm:$0xff] 0.0
    %31 = vst [vmem:[#allocation2 + $0x48] sm:$0xff] 0.0
    %32 = vst [vmem:[#allocation2 + $0x50] sm:$0xff] 0.0
    %33 = vst [vmem:[#allocation2 + $0x58] sm:$0xff] 0.0
    %34 = vst [vmem:[#allocation2 + $0x60] sm:$0xff] 0.0
    %35 = vst [vmem:[#allocation2 + $0x68] sm:$0xff] 0.0
    %36 = vst [vmem:[#allocation2 + $0x70] sm:$0xff] 0.0
    %37 = vst [vmem:[#allocation2 + $0x78] sm:$0xff] 0.0
  $region21: #{gcn_forward.4} parent=0 // pred_fallthru
    _
  %v38 = vld [vmem:[#allocation2] sm:$0xff]
  %v39 = vld [vmem:[#allocation2 + $0x8] sm:$0xff]
  %v40 = vld [vmem:[#allocation2 + $0x10] sm:$0xff]
  %v41 = vld [vmem:[#allocation2 + $0x18] sm:$0xff]
  %v42 = vld [vmem:[#allocation2 + $0x20] sm:$0xff]
  %v43 = vld [vmem:[#allocation2 + $0x28] sm:$0xff]
  %v44 = vld [vmem:[#allocation2 + $0x30] sm:$0xff]
  %v45 = vld [vmem:[#allocation2 + $0x38] sm:$0xff]
  %v46 = vld [vmem:[#allocation2 + $0x40] sm:$0xff]
  %v47 = vld [vmem:[#allocation2 + $0x48] sm:$0xff]
  %v48 = vld [vmem:[#allocation2 + $0x50] sm:$0xff]
  %v49 = vld [vmem:[#allocation2 + $0x58] sm:$0xff]
  %v50 = vld [vmem:[#allocation2 + $0x60] sm:$0xff]
  %v51 = vld [vmem:[#allocation2 + $0x68] sm:$0xff]
  %v52 = vld [vmem:[#allocation2 + $0x70] sm:$0xff]
  %v53 = vld [vmem:[#allocation2 + $0x78] sm:$0xff]
  %v54 = vld [vmem:[%s0] sm:$0xf]
  %v55 = vld [vmem:[%s0 + $0x4] sm:$0xf]
  %v56 = vld [vmem:[%s0 + $0x8] sm:$0xf]
  %v57 = vld [vmem:[%s0 + $0xc] sm:$0xf]
  %v58 = vld [vmem:[%s0 + $0x10] sm:$0xf]
  %v59 = vld [vmem:[%s0 + $0x14] sm:$0xf]
  %v60 = vld [vmem:[%s0 + $0x18] sm:$0xf]
  %v61 = vld [vmem:[%s0 + $0x1c] sm:$0xf]
  %v62 = vld [vmem:[%s0 + $0x20] sm:$0xf]
  %v63 = vld [vmem:[%s0 + $0x24] sm:$0xf]
  %v64 = vld [vmem:[%s0 + $0x28] sm:$0xf]
  %v65 = vld [vmem:[%s0 + $0x2c] sm:$0xf]
  %v66 = vld [vmem:[%s0 + $0x30] sm:$0xf]
  %v67 = vld [vmem:[%s0 + $0x34] sm:$0xf]
  %v68 = vld [vmem:[%s0 + $0x38] sm:$0xf]
  %v69 = vld [vmem:[%s0 + $0x3c] sm:$0xf]
  %v70 = vld [vmem:[%s1] sm:$0xf]
  %v71 = vld [vmem:[%s1 + $0x4] sm:$0xf]
  %v72 = vld [vmem:[%s1 + $0x8] sm:$0xf]
  %v73 = vld [vmem:[%s1 + $0xc] sm:$0xf]
  %v74 = vld [vmem:[%s1 + $0x10] sm:$0xf]
  %v75 = vld [vmem:[%s1 + $0x14] sm:$0xf]
  %v76 = vld [vmem:[%s1 + $0x18] sm:$0xf]
  %v77 = vld [vmem:[%s1 + $0x1c] sm:$0xf]
  %v78 = vld [vmem:[%s1 + $0x20] sm:$0xf]
  %v79 = vld [vmem:[%s1 + $0x24] sm:$0xf]
  %v80 = vld [vmem:[%s1 + $0x28] sm:$0xf]
  %v81 = vld [vmem:[%s1 + $0x2c] sm:$0xf]
  %v82 = vld [vmem:[%s1 + $0x30] sm:$0xf]
  %v83 = vld [vmem:[%s1 + $0x34] sm:$0xf]
  %v84 = vld [vmem:[%s1 + $0x38] sm:$0xf]
  %v85 = vld [vmem:[%s1 + $0x3c] sm:$0xf]
  %v102 = vunpack.c.l.b16 %v54
  %v103 = vunpack.c.l.b16 %v55
  %v104 = vunpack.c.l.b16 %v56
  %v105 = vunpack.c.l.b16 %v57
  %v106 = vunpack.c.l.b16 %v58
  %v107 = vunpack.c.l.b16 %v59
  %v108 = vunpack.c.l.b16 %v60
  %v109 = vunpack.c.l.b16 %v61
  %v110 = vunpack.c.l.b16 %v62
  %v111 = vunpack.c.l.b16 %v63
  %v112 = vunpack.c.l.b16 %v64
  %v113 = vunpack.c.l.b16 %v65
  %v114 = vunpack.c.l.b16 %v66
  %v115 = vunpack.c.l.b16 %v67
  %v116 = vunpack.c.l.b16 %v68
  %v117 = vunpack.c.l.b16 %v69
  %v118 = vpack.c.b16 %v103, %v102
  %v119 = vpack.c.b16 %v105, %v104
  %v120 = vpack.c.b16 %v107, %v106
  %v121 = vpack.c.b16 %v109, %v108
  %v122 = vpack.c.b16 %v111, %v110
  %v123 = vpack.c.b16 %v113, %v112
  %v124 = vpack.c.b16 %v115, %v114
  %v125 = vpack.c.b16 %v117, %v116
  %v150 = vunpack.c.l.b16 %v70
  %v151 = vunpack.c.l.b16 %v71
  %v152 = vunpack.c.l.b16 %v72
  %v153 = vunpack.c.l.b16 %v73
  %v154 = vunpack.c.l.b16 %v74
  %v155 = vunpack.c.l.b16 %v75
  %v156 = vunpack.c.l.b16 %v76
  %v157 = vunpack.c.l.b16 %v77
  %v158 = vunpack.c.l.b16 %v78
  %v159 = vunpack.c.l.b16 %v79
  %v160 = vunpack.c.l.b16 %v80
  %v161 = vunpack.c.l.b16 %v81
  %v162 = vunpack.c.l.b16 %v82
  %v163 = vunpack.c.l.b16 %v83
  %v164 = vunpack.c.l.b16 %v84
  %v165 = vunpack.c.l.b16 %v85
  %v166 = vpack.c.b16 %v151, %v150
  %v167 = vpack.c.b16 %v153, %v152
  %v168 = vpack.c.b16 %v155, %v154
  %v169 = vpack.c.b16 %v157, %v156
  %v170 = vpack.c.b16 %v159, %v158
  %v171 = vpack.c.b16 %v161, %v160
  %v172 = vpack.c.b16 %v163, %v162
  %v173 = vpack.c.b16 %v165, %v164
  %182 = vmatprep.subr.bf16.mxu0 0
  %183 = vmatpush1.bf16.msra.mxu0 %v173
  %184 = vmatprep.subr.bf16.mxu0 0
  %185 = vmatpush1.bf16.msra.mxu0 %v172
  %186 = vmatprep.subr.bf16.mxu0 0
  %187 = vmatpush1.bf16.msra.mxu0 %v171
  %188 = vmatprep.subr.bf16.mxu0 0
  %189 = vmatpush1.bf16.msra.mxu0 %v170
  %190 = vmatprep.subr.bf16.mxu0 0
  %191 = vmatpush1.bf16.msra.mxu0 %v169
  %192 = vmatprep.subr.bf16.mxu0 0
  %193 = vmatpush1.bf16.msra.mxu0 %v168
  %194 = vmatprep.subr.bf16.mxu0 0
  %195 = vmatpush1.bf16.msra.mxu0 %v167
  %196 = vmatprep.subr.bf16.mxu0 0
  %197 = vmatpush1.bf16.msra.mxu0 %v166
  %198 = vmatprep.subr.bf16.mxu0 0
  %199 = vmatpush2.bf16.msra.mxu0 0
  %200 = vmatprep.subr.bf16.mxu0 0
  %201 = vmatpush2.bf16.msra.mxu0 0
  %202 = vmatprep.subr.bf16.mxu0 0
  %203 = vmatpush2.bf16.msra.mxu0 0
  %204 = vmatprep.subr.bf16.mxu0 0
  %205 = vmatpush2.bf16.msra.mxu0 0
  %206 = vmatprep.subr.bf16.mxu0 0
  %207 = vmatpush2.bf16.msra.mxu0 0
  %208 = vmatprep.subr.bf16.mxu0 0
  %209 = vmatpush2.bf16.msra.mxu0 0
  %210 = vmatprep.subr.bf16.mxu0 0
  %211 = vmatpush2.bf16.msra.mxu0 0
  %212 = vmatprep.subr.bf16.mxu0 0
  %213 = vmatpush2.bf16.msra.mxu0 0
  %214 = vmatprep.mubr.bf16.mxu0 0
  %215 = vmatmul.mubr.bf16.gmra.mxu0 %v118
  %v216 = vpop.f32.mrf.mxu0
  %v217 = vadd.f32 0.0, %v216
  %v218 = vpop.f32.mrf.mxu0
  %v219 = vpop.f32.mrf.mxu0
  %v220 = vadd.f32 0.0, %v219
  %v221 = vpop.f32.mrf.mxu0
  %222 = vmatprep.mubr.bf16.mxu0 0
  %223 = vmatmul.mubr.bf16.gmra.mxu0 %v119
  %v224 = vpop.f32.mrf.mxu0
  %v225 = vadd.f32 0.0, %v224
  %v226 = vpop.f32.mrf.mxu0
  %v227 = vpop.f32.mrf.mxu0
  %v228 = vadd.f32 0.0, %v227
  %v229 = vpop.f32.mrf.mxu0
  %230 = vmatprep.mubr.bf16.mxu0 0
  %231 = vmatmul.mubr.bf16.gmra.mxu0 %v120
  %v232 = vpop.f32.mrf.mxu0
  %v233 = vadd.f32 0.0, %v232
  %v234 = vpop.f32.mrf.mxu0
  %v235 = vpop.f32.mrf.mxu0
  %v236 = vadd.f32 0.0, %v235
  %v237 = vpop.f32.mrf.mxu0
  %238 = vmatprep.mubr.bf16.mxu0 0
  %239 = vmatmul.mubr.bf16.gmra.mxu0 %v121
  %v240 = vpop.f32.mrf.mxu0
  %v241 = vadd.f32 0.0, %v240
  %v242 = vpop.f32.mrf.mxu0
  %v243 = vpop.f32.mrf.mxu0
  %v244 = vadd.f32 0.0, %v243
  %v245 = vpop.f32.mrf.mxu0
  %246 = vmatprep.mubr.bf16.mxu0 0
  %247 = vmatmul.mubr.bf16.gmra.mxu0 %v122
  %v248 = vpop.f32.mrf.mxu0
  %v249 = vadd.f32 0.0, %v248
  %v250 = vpop.f32.mrf.mxu0
  %v251 = vpop.f32.mrf.mxu0
  %v252 = vadd.f32 0.0, %v251
  %v253 = vpop.f32.mrf.mxu0
  %254 = vmatprep.mubr.bf16.mxu0 0
  %255 = vmatmul.mubr.bf16.gmra.mxu0 %v123
  %v256 = vpop.f32.mrf.mxu0
  %v257 = vadd.f32 0.0, %v256
  %v258 = vpop.f32.mrf.mxu0
  %v259 = vpop.f32.mrf.mxu0
  %v260 = vadd.f32 0.0, %v259
  %v261 = vpop.f32.mrf.mxu0
  %262 = vmatprep.mubr.bf16.mxu0 0
  %263 = vmatmul.mubr.bf16.gmra.mxu0 %v124
  %v264 = vpop.f32.mrf.mxu0
  %v265 = vadd.f32 0.0, %v264
  %v266 = vpop.f32.mrf.mxu0
  %v267 = vpop.f32.mrf.mxu0
  %v268 = vadd.f32 0.0, %v267
  %v269 = vpop.f32.mrf.mxu0
  %270 = vmatprep.mubr.bf16.mxu0 0
  %271 = vmatmul.mubr.bf16.gmra.mxu0 %v125
  %v272 = vpop.f32.mrf.mxu0
  %v273 = vadd.f32 0.0, %v272
  %v274 = vpop.f32.mrf.mxu0
  %v275 = vpop.f32.mrf.mxu0
  %v276 = vadd.f32 0.0, %v275
  %v277 = vpop.f32.mrf.mxu0
  %278 = vdwg.mxu0
  %v279 = vadd.f32 %v38, %v217
  %v280 = vadd.f32 %v39, %v220
  %v281 = vadd.f32 %v40, %v225
  %v282 = vadd.f32 %v41, %v228
  %v283 = vadd.f32 %v42, %v233
  %v284 = vadd.f32 %v43, %v236
  %v285 = vadd.f32 %v44, %v241
  %v286 = vadd.f32 %v45, %v244
  %v287 = vadd.f32 %v46, %v249
  %v288 = vadd.f32 %v47, %v252
  %v289 = vadd.f32 %v48, %v257
  %v290 = vadd.f32 %v49, %v260
  %v291 = vadd.f32 %v50, %v265
  %v292 = vadd.f32 %v51, %v268
  %v293 = vadd.f32 %v52, %v273
  %v294 = vadd.f32 %v53, %v276
  %295 = vst [vmem:[#allocation2] sm:$0xff] %v279
  %296 = vst [vmem:[#allocation2 + $0x8] sm:$0xff] %v280
  %297 = vst [vmem:[#allocation2 + $0x10] sm:$0xff] %v281
  %298 = vst [vmem:[#allocation2 + $0x18] sm:$0xff] %v282
  %299 = vst [vmem:[#allocation2 + $0x20] sm:$0xff] %v283
  %300 = vst [vmem:[#allocation2 + $0x28] sm:$0xff] %v284
  %301 = vst [vmem:[#allocation2 + $0x30] sm:$0xff] %v285
  %302 = vst [vmem:[#allocation2 + $0x38] sm:$0xff] %v286
  %303 = vst [vmem:[#allocation2 + $0x40] sm:$0xff] %v287
  %304 = vst [vmem:[#allocation2 + $0x48] sm:$0xff] %v288
  %305 = vst [vmem:[#allocation2 + $0x50] sm:$0xff] %v289
  %306 = vst [vmem:[#allocation2 + $0x58] sm:$0xff] %v290
  %307 = vst [vmem:[#allocation2 + $0x60] sm:$0xff] %v291
  %308 = vst [vmem:[#allocation2 + $0x68] sm:$0xff] %v292
  %309 = vst [vmem:[#allocation2 + $0x70] sm:$0xff] %v293
  %310 = vst [vmem:[#allocation2 + $0x78] sm:$0xff] %v294
  // Predicated region
  $region22: #{gcn_forward.4} parent=0 // pred_check
    %p311 = pneg %p18
  $region23: #{gcn_forward.4} parent=0 // pred_check_branch
    %313 = sbr.rel (%p311) target = $region25
  $region24: #{gcn_forward.4} parent=0 // pred_region
    %v314 = vld [vmem:[#allocation2] sm:$0xff]
    %v315 = vld [vmem:[#allocation2 + $0x8] sm:$0xff]
    %v316 = vld [vmem:[#allocation2 + $0x10] sm:$0xff]
    %v317 = vld [vmem:[#allocation2 + $0x18] sm:$0xff]
    %v318 = vld [vmem:[#allocation2 + $0x20] sm:$0xff]
    %v319 = vld [vmem:[#allocation2 + $0x28] sm:$0xff]
    %v320 = vld [vmem:[#allocation2 + $0x30] sm:$0xff]
    %v321 = vld [vmem:[#allocation2 + $0x38] sm:$0xff]
    %v322 = vld [vmem:[#allocation2 + $0x40] sm:$0xff]
    %v323 = vld [vmem:[#allocation2 + $0x48] sm:$0xff]
    %v324 = vld [vmem:[#allocation2 + $0x50] sm:$0xff]
    %v325 = vld [vmem:[#allocation2 + $0x58] sm:$0xff]
    %v326 = vld [vmem:[#allocation2 + $0x60] sm:$0xff]
    %v327 = vld [vmem:[#allocation2 + $0x68] sm:$0xff]
    %v328 = vld [vmem:[#allocation2 + $0x70] sm:$0xff]
    %v329 = vld [vmem:[#allocation2 + $0x78] sm:$0xff]
    %v330 = vld [vmem:[%s2] sm:$0x1]
    %v332 = vlaneseq
    %v333 = vshrl.u32 %v332, 7
    %v334 = vsub.s32 0, %v333
    %v335 = vrot.slane %v330, %v334
    %v337 = vadd.f32 %v314, %v335
    %v338 = vadd.f32 %v315, %v335
    %v339 = vadd.f32 %v316, %v335
    %v340 = vadd.f32 %v317, %v335
    %v341 = vadd.f32 %v318, %v335
    %v342 = vadd.f32 %v319, %v335
    %v343 = vadd.f32 %v320, %v335
    %v344 = vadd.f32 %v321, %v335
    %v345 = vadd.f32 %v322, %v335
    %v346 = vadd.f32 %v323, %v335
    %v347 = vadd.f32 %v324, %v335
    %v348 = vadd.f32 %v325, %v335
    %v349 = vadd.f32 %v326, %v335
    %v350 = vadd.f32 %v327, %v335
    %v351 = vadd.f32 %v328, %v335
    %v352 = vadd.f32 %v329, %v335
    %v353 = vmax.f32 %v337, 0.0
    %v354 = vmax.f32 %v338, 0.0
    %v355 = vmax.f32 %v339, 0.0
    %v356 = vmax.f32 %v340, 0.0
    %v357 = vmax.f32 %v341, 0.0
    %v358 = vmax.f32 %v342, 0.0
    %v359 = vmax.f32 %v343, 0.0
    %v360 = vmax.f32 %v344, 0.0
    %v361 = vmax.f32 %v345, 0.0
    %v362 = vmax.f32 %v346, 0.0
    %v363 = vmax.f32 %v347, 0.0
    %v364 = vmax.f32 %v348, 0.0
    %v365 = vmax.f32 %v349, 0.0
    %v366 = vmax.f32 %v350, 0.0
    %v367 = vmax.f32 %v351, 0.0
    %v368 = vmax.f32 %v352, 0.0
    %v369 = vpack.c.bf16 %v354, %v353
    %v370 = vpack.c.bf16 %v356, %v355
    %v371 = vpack.c.bf16 %v358, %v357
    %v372 = vpack.c.bf16 %v360, %v359
    %v373 = vpack.c.bf16 %v362, %v361
    %v374 = vpack.c.bf16 %v364, %v363
    %v375 = vpack.c.bf16 %v366, %v365
    %v376 = vpack.c.bf16 %v368, %v367
    %v377 = vld [vmem:[%s3] sm:$0xf]
    %v378 = vld [vmem:[%s3 + $0x4] sm:$0xf]
    %v379 = vld [vmem:[%s3 + $0x8] sm:$0xf]
    %v380 = vld [vmem:[%s3 + $0xc] sm:$0xf]
    %v381 = vld [vmem:[%s3 + $0x10] sm:$0xf]
    %v382 = vld [vmem:[%s3 + $0x14] sm:$0xf]
    %v383 = vld [vmem:[%s3 + $0x18] sm:$0xf]
    %v384 = vld [vmem:[%s3 + $0x1c] sm:$0xf]
    %v385 = vld [vmem:[%s3 + $0x20] sm:$0xf]
    %v386 = vld [vmem:[%s3 + $0x24] sm:$0xf]
    %v387 = vld [vmem:[%s3 + $0x28] sm:$0xf]
    %v388 = vld [vmem:[%s3 + $0x2c] sm:$0xf]
    %v389 = vld [vmem:[%s3 + $0x30] sm:$0xf]
    %v390 = vld [vmem:[%s3 + $0x34] sm:$0xf]
    %v391 = vld [vmem:[%s3 + $0x38] sm:$0xf]
    %v392 = vld [vmem:[%s3 + $0x3c] sm:$0xf]
    %v409 = vunpack.c.l.b16 %v377
    %v410 = vunpack.c.l.b16 %v378
    %v411 = vunpack.c.l.b16 %v379
    %v412 = vunpack.c.l.b16 %v380
    %v413 = vunpack.c.l.b16 %v381
    %v414 = vunpack.c.l.b16 %v382
    %v415 = vunpack.c.l.b16 %v383
    %v416 = vunpack.c.l.b16 %v384
    %v417 = vunpack.c.l.b16 %v385
    %v418 = vunpack.c.l.b16 %v386
    %v419 = vunpack.c.l.b16 %v387
    %v420 = vunpack.c.l.b16 %v388
    %v421 = vunpack.c.l.b16 %v389
    %v422 = vunpack.c.l.b16 %v390
    %v423 = vunpack.c.l.b16 %v391
    %v424 = vunpack.c.l.b16 %v392
    %v425 = vpack.c.b16 %v410, %v409
    %v426 = vpack.c.b16 %v412, %v411
    %v427 = vpack.c.b16 %v414, %v413
    %v428 = vpack.c.b16 %v416, %v415
    %v429 = vpack.c.b16 %v418, %v417
    %v430 = vpack.c.b16 %v420, %v419
    %v431 = vpack.c.b16 %v422, %v421
    %v432 = vpack.c.b16 %v424, %v423
    %441 = vmatprep.subr.bf16.mxu0 0
    %442 = vmatpush1.bf16.msra.mxu0 %v432
    %443 = vmatprep.subr.bf16.mxu0 0
    %444 = vmatpush1.bf16.msra.mxu0 %v431
    %445 = vmatprep.subr.bf16.mxu0 0
    %446 = vmatpush1.bf16.msra.mxu0 %v430
    %447 = vmatprep.subr.bf16.mxu0 0
    %448 = vmatpush1.bf16.msra.mxu0 %v429
    %449 = vmatprep.subr.bf16.mxu0 0
    %450 = vmatpush1.bf16.msra.mxu0 %v428
    %451 = vmatprep.subr.bf16.mxu0 0
    %452 = vmatpush1.bf16.msra.mxu0 %v427
    %453 = vmatprep.subr.bf16.mxu0 0
    %454 = vmatpush1.bf16.msra.mxu0 %v426
    %455 = vmatprep.subr.bf16.mxu0 0
    %456 = vmatpush1.bf16.msra.mxu0 %v425
    %457 = vmatprep.subr.bf16.mxu0 0
    %458 = vmatpush2.bf16.msra.mxu0 0
    %459 = vmatprep.subr.bf16.mxu0 0
    %460 = vmatpush2.bf16.msra.mxu0 0
    %461 = vmatprep.subr.bf16.mxu0 0
    %462 = vmatpush2.bf16.msra.mxu0 0
    %463 = vmatprep.subr.bf16.mxu0 0
    %464 = vmatpush2.bf16.msra.mxu0 0
    %465 = vmatprep.subr.bf16.mxu0 0
    %466 = vmatpush2.bf16.msra.mxu0 0
    %467 = vmatprep.subr.bf16.mxu0 0
    %468 = vmatpush2.bf16.msra.mxu0 0
    %469 = vmatprep.subr.bf16.mxu0 0
    %470 = vmatpush2.bf16.msra.mxu0 0
    %471 = vmatprep.subr.bf16.mxu0 0
    %472 = vmatpush2.bf16.msra.mxu0 0
    %473 = vmatprep.mubr.bf16.mxu0 0
    %474 = vmatmul.mubr.bf16.gmra.mxu0 %v369
    %v475 = vpop.f32.mrf.mxu0
    %v476 = vadd.f32 0.0, %v475
    %v477 = vpop.f32.mrf.mxu0
    %v478 = vpop.f32.mrf.mxu0
    %v479 = vadd.f32 0.0, %v478
    %v480 = vpop.f32.mrf.mxu0
    %481 = vmatprep.mubr.bf16.mxu0 0
    %482 = vmatmul.mubr.bf16.gmra.mxu0 %v370
    %v483 = vpop.f32.mrf.mxu0
    %v484 = vadd.f32 0.0, %v483
    %v485 = vpop.f32.mrf.mxu0
    %v486 = vpop.f32.mrf.mxu0
    %v487 = vadd.f32 0.0, %v486
    %v488 = vpop.f32.mrf.mxu0
    %489 = vmatprep.mubr.bf16.mxu0 0
    %490 = vmatmul.mubr.bf16.gmra.mxu0 %v371
    %v491 = vpop.f32.mrf.mxu0
    %v492 = vadd.f32 0.0, %v491
    %v493 = vpop.f32.mrf.mxu0
    %v494 = vpop.f32.mrf.mxu0
    %v495 = vadd.f32 0.0, %v494
    %v496 = vpop.f32.mrf.mxu0
    %497 = vmatprep.mubr.bf16.mxu0 0
    %498 = vmatmul.mubr.bf16.gmra.mxu0 %v372
    %v499 = vpop.f32.mrf.mxu0
    %v500 = vadd.f32 0.0, %v499
    %v501 = vpop.f32.mrf.mxu0
    %v502 = vpop.f32.mrf.mxu0
    %v503 = vadd.f32 0.0, %v502
    %v504 = vpop.f32.mrf.mxu0
    %505 = vmatprep.mubr.bf16.mxu0 0
    %506 = vmatmul.mubr.bf16.gmra.mxu0 %v373
    %v507 = vpop.f32.mrf.mxu0
    %v508 = vadd.f32 0.0, %v507
    %v509 = vpop.f32.mrf.mxu0
    %v510 = vpop.f32.mrf.mxu0
    %v511 = vadd.f32 0.0, %v510
    %v512 = vpop.f32.mrf.mxu0
    %513 = vmatprep.mubr.bf16.mxu0 0
    %514 = vmatmul.mubr.bf16.gmra.mxu0 %v374
    %v515 = vpop.f32.mrf.mxu0
    %v516 = vadd.f32 0.0, %v515
    %v517 = vpop.f32.mrf.mxu0
    %v518 = vpop.f32.mrf.mxu0
    %v519 = vadd.f32 0.0, %v518
    %v520 = vpop.f32.mrf.mxu0
    %521 = vmatprep.mubr.bf16.mxu0 0
    %522 = vmatmul.mubr.bf16.gmra.mxu0 %v375
    %v523 = vpop.f32.mrf.mxu0
    %v524 = vadd.f32 0.0, %v523
    %v525 = vpop.f32.mrf.mxu0
    %v526 = vpop.f32.mrf.mxu0
    %v527 = vadd.f32 0.0, %v526
    %v528 = vpop.f32.mrf.mxu0
    %529 = vmatprep.mubr.bf16.mxu0 0
    %530 = vmatmul.mubr.bf16.gmra.mxu0 %v376
    %v531 = vpop.f32.mrf.mxu0
    %v532 = vadd.f32 0.0, %v531
    %v533 = vpop.f32.mrf.mxu0
    %v534 = vpop.f32.mrf.mxu0
    %v535 = vadd.f32 0.0, %v534
    %v536 = vpop.f32.mrf.mxu0
    %537 = vdwg.mxu0
    %v538 = vpack.c.bf16 %v479, %v476
    %v539 = vpack.c.bf16 %v487, %v484
    %v540 = vpack.c.bf16 %v495, %v492
    %v541 = vpack.c.bf16 %v503, %v500
    %v542 = vpack.c.bf16 %v511, %v508
    %v543 = vpack.c.bf16 %v519, %v516
    %v544 = vpack.c.bf16 %v527, %v524
    %v545 = vpack.c.bf16 %v535, %v532
    %v554 = vunpack.c.l.b16 %v538
    %v555 = vunpack.c.h.b16 %v538
    %v556 = vunpack.c.l.b16 %v539
    %v557 = vunpack.c.h.b16 %v539
    %v558 = vunpack.c.l.b16 %v540
    %v559 = vunpack.c.h.b16 %v540
    %v560 = vunpack.c.l.b16 %v541
    %v561 = vunpack.c.h.b16 %v541
    %v562 = vunpack.c.l.b16 %v542
    %v563 = vunpack.c.h.b16 %v542
    %v564 = vunpack.c.l.b16 %v543
    %v565 = vunpack.c.h.b16 %v543
    %v566 = vunpack.c.l.b16 %v544
    %v567 = vunpack.c.h.b16 %v544
    %v568 = vunpack.c.l.b16 %v545
    %v569 = vunpack.c.h.b16 %v545
    %v570 = vpack.c.b16 %v554, %v554
    %v571 = vpack.c.b16 %v555, %v555
    %v572 = vpack.c.b16 %v556, %v556
    %v573 = vpack.c.b16 %v557, %v557
    %v574 = vpack.c.b16 %v558, %v558
    %v575 = vpack.c.b16 %v559, %v559
    %v576 = vpack.c.b16 %v560, %v560
    %v577 = vpack.c.b16 %v561, %v561
    %v578 = vpack.c.b16 %v562, %v562
    %v579 = vpack.c.b16 %v563, %v563
    %v580 = vpack.c.b16 %v564, %v564
    %v581 = vpack.c.b16 %v565, %v565
    %v582 = vpack.c.b16 %v566, %v566
    %v583 = vpack.c.b16 %v567, %v567
    %v584 = vpack.c.b16 %v568, %v568
    %v585 = vpack.c.b16 %v569, %v569
    %602 = vst [vmem:[%s4] sm:$0xf] %v570
    %603 = vst [vmem:[%s4 + $0x4] sm:$0xf] %v571
    %604 = vst [vmem:[%s4 + $0x8] sm:$0xf] %v572
    %605 = vst [vmem:[%s4 + $0xc] sm:$0xf] %v573
    %606 = vst [vmem:[%s4 + $0x10] sm:$0xf] %v574
    %607 = vst [vmem:[%s4 + $0x14] sm:$0xf] %v575
    %608 = vst [vmem:[%s4 + $0x18] sm:$0xf] %v576
    %609 = vst [vmem:[%s4 + $0x1c] sm:$0xf] %v577
    %610 = vst [vmem:[%s4 + $0x20] sm:$0xf] %v578
    %611 = vst [vmem:[%s4 + $0x24] sm:$0xf] %v579
    %612 = vst [vmem:[%s4 + $0x28] sm:$0xf] %v580
    %613 = vst [vmem:[%s4 + $0x2c] sm:$0xf] %v581
    %614 = vst [vmem:[%s4 + $0x30] sm:$0xf] %v582
    %615 = vst [vmem:[%s4 + $0x34] sm:$0xf] %v583
    %616 = vst [vmem:[%s4 + $0x38] sm:$0xf] %v584
    %617 = vst [vmem:[%s4 + $0x3c] sm:$0xf] %v585
  $region25: #{gcn_forward.4} parent=0 // pred_fallthru
    _
  // Predicated region
  $region26: #{gcn_forward.4} parent=0 // pred_check
    _
  $region27: #{gcn_forward.4} parent=0 // pred_check_branch
    %619 = sbr.rel (0) target = $region29
  $region28: #{gcn_forward.4} parent=0 // pred_region
    _
  $region29: #{gcn_forward.4} parent=0 // pred_fallthru
    _
  // Predicated region
  $region30: #{gcn_forward.4} parent=0 // pred_check
    _
  $region31: #{gcn_forward.4} parent=0 // pred_check_branch
    %621 = sbr.rel (0) target = $region33
  $region32: #{gcn_forward.4} parent=0 // pred_region
    _
  $region33: #{gcn_forward.4} parent=0 // pred_fallthru
    _

</llo_original>
